<compile_context>
chip_gen: v7x
topology: tpu7x:2x2x1
jax: 0.10.0
libtpu: 0.0.40
codegen_flags: <defaults>
</compile_context>

<pallas_src>
import functools

import jax
import jax.numpy as jnp
from jax.experimental import pallas as pl
from jax.experimental.pallas import tpu as pltpu

LANE = 128                 # feature dims padded to the lane width
MAX_ROW_TILE = 512         # node-row stripe of A per grid step (sweepable)
VMEM_LIMIT = 32 * 1024 * 1024  # safe on v5e/v6e/v7x; actual use at demo scale ~1 MB


def _round_up(n, m):
    return (n + m - 1) // m * m


def _node_padding(n):
    n_p = _round_up(max(n, LANE), LANE)
    row_tile = min(MAX_ROW_TILE, n_p)
    n_p = _round_up(n_p, row_tile)
    return n_p, row_tile


def _pad2d(x, rows, cols):
    return jnp.pad(x, ((0, rows - x.shape[0]), (0, cols - x.shape[1])))


# ---------------------------------------------------------------------------
# Fused kernel: conv1 -> ReLU -> conv2 (transform) -> mean-pool -> fc -> log_softmax
# ---------------------------------------------------------------------------
def gcn_fused_kernel(a_ref, x_ref, pa_ref, w1_ref, b1_ref, w2_ref, b2_ref,
                     wfc_ref, bfc_ref, o_ref, z1_ref, pooled_ref, *, out_dim):
    i = pl.program_id(0)

    @pl.when(i == 0)
    def _():
        # Z1 = X @ W1 computed once; stays VMEM-resident (bf16) for all stripes.
        z1_ref[...] = jnp.dot(
            x_ref[...], w1_ref[...],
            preferred_element_type=jnp.float32).astype(z1_ref.dtype)
        pooled_ref[...] = jnp.zeros_like(pooled_ref)

    # conv1 aggregation for this row stripe: H1 = ReLU(A[i,:] @ Z1 + b1)
    h1 = jnp.dot(a_ref[...], z1_ref[...], preferred_element_type=jnp.float32)
    h1 = jnp.maximum(h1 + b1_ref[...], 0.0)

    # conv2 feature transform for this stripe: Z2 = H1 @ W2
    z2 = jnp.dot(h1.astype(w2_ref.dtype), w2_ref[...],
                 preferred_element_type=jnp.float32)

    # mean-pool partial (pooling folded through conv2's aggregation):
    #   pooled += (P @ A_norm)[:, stripe i] @ Z2[stripe i]
    pooled_ref[...] += jnp.dot(pa_ref[...], z2.astype(pa_ref.dtype),
                               preferred_element_type=jnp.float32)

    @pl.when(i == pl.num_programs(0) - 1)
    def _():
        pooled = pooled_ref[...] + b2_ref[...]          # conv2 bias (mean of bias = bias)
        logits = jnp.dot(pooled.astype(wfc_ref.dtype), wfc_ref[...],
                         preferred_element_type=jnp.float32) + bfc_ref[...]
        # masked log_softmax: only the first `out_dim` (real) columns count
        col = jax.lax.broadcasted_iota(jnp.int32, logits.shape, 1)
        valid = col < out_dim
        masked = jnp.where(valid, logits, -1e30)
        m = jnp.max(masked, axis=1, keepdims=True)
        shifted = masked - m
        lse = jnp.log(jnp.sum(jnp.where(valid, jnp.exp(shifted), 0.0),
                              axis=1, keepdims=True))
        o_ref[...] = shifted - lse


def _fused_forward(a_bf, x_bf, pa_bf, w1_bf, b1_f, w2_bf, b2_f, wfc_bf, bfc_f,
                   *, out_dim):
    n_p = a_bf.shape[0]
    f_p = x_bf.shape[1]
    h_p = w1_bf.shape[1]
    o_p = wfc_bf.shape[1]
    g_p = pa_bf.shape[0]
    row_tile = min(MAX_ROW_TILE, n_p)
    blocks = n_p // row_tile

    kernel = functools.partial(gcn_fused_kernel, out_dim=out_dim)
    flops = (2 * n_p * f_p * h_p + 2 * n_p * n_p * h_p + 2 * n_p * h_p * h_p
             + 2 * g_p * n_p * h_p + 2 * g_p * h_p * o_p)
    bytes_accessed = (2 * (n_p * n_p + n_p * f_p + g_p * n_p
                           + f_p * h_p + h_p * h_p + h_p * o_p)
                      + 4 * (2 * h_p + o_p + g_p * o_p))

    return pl.pallas_call(
        kernel,
        out_shape=jax.ShapeDtypeStruct((g_p, o_p), jnp.float32),
        grid_spec=pltpu.PrefetchScalarGridSpec(
            num_scalar_prefetch=0,
            grid=(blocks,),
            in_specs=[
                pl.BlockSpec((row_tile, n_p), lambda i: (i, 0)),  # A row stripe (streams)
                pl.BlockSpec((n_p, f_p), lambda i: (0, 0)),       # X (VMEM-resident)
                pl.BlockSpec((g_p, row_tile), lambda i: (0, i)),  # PA column block
                pl.BlockSpec((f_p, h_p), lambda i: (0, 0)),       # W1 (resident)
                pl.BlockSpec((1, h_p), lambda i: (0, 0)),         # b1
                pl.BlockSpec((h_p, h_p), lambda i: (0, 0)),       # W2 (resident)
                pl.BlockSpec((1, h_p), lambda i: (0, 0)),         # b2
                pl.BlockSpec((h_p, o_p), lambda i: (0, 0)),       # Wfc (resident)
                pl.BlockSpec((1, o_p), lambda i: (0, 0)),         # bfc
            ],
            out_specs=pl.BlockSpec((g_p, o_p), lambda i: (0, 0)),
            scratch_shapes=[
                pltpu.VMEM((n_p, h_p), jnp.bfloat16),  # Z1 = X @ W1 (resident)
                pltpu.VMEM((g_p, h_p), jnp.float32),   # pooled accumulator
            ],
        ),
        # grid axis carries the pooled accumulation + Z1 init -> must be "arbitrary"
        compiler_params=pltpu.CompilerParams(
            dimension_semantics=("arbitrary",),
            vmem_limit_bytes=VMEM_LIMIT),
        cost_estimate=pl.CostEstimate(
            flops=flops, transcendentals=g_p * o_p,
            bytes_accessed=bytes_accessed),
    )(a_bf, x_bf, pa_bf, w1_bf, b1_f, w2_bf, b2_f, wfc_bf, bfc_f)


@functools.partial(jax.jit, static_argnames=("num_graphs", "out_dim"))
def gcn_forward(a_bf, pa_bf, x, w1, b1, w2, b2, wfc, bfc, *, num_graphs, out_dim):
    """Forward: conv1 -> ReLU -> conv2 -> global_mean_pool -> fc -> log_softmax."""
    n_p = a_bf.shape[0]
    f_p = _round_up(w1.shape[0], LANE)
    h_p = _round_up(w1.shape[1], LANE)
    o_p = _round_up(out_dim, LANE)

    # small O(N*F)/O(H^2) pads + casts (the O(N^2) A/PA prep is hoisted out)
    x_bf = _pad2d(x, n_p, f_p).astype(jnp.bfloat16)
    w1_bf = _pad2d(w1, f_p, h_p).astype(jnp.bfloat16)
    w2_bf = _pad2d(w2, h_p, h_p).astype(jnp.bfloat16)
    wfc_bf = _pad2d(wfc, h_p, o_p).astype(jnp.bfloat16)
    b1_p = _pad2d(b1, 1, h_p).astype(jnp.float32)
    b2_p = _pad2d(b2, 1, h_p).astype(jnp.float32)
    bfc_p = _pad2d(bfc, 1, o_p).astype(jnp.float32)

    out_padded = _fused_forward(a_bf, x_bf, pa_bf, w1_bf, b1_p, w2_bf, b2_p,
                                wfc_bf, bfc_p, out_dim=out_dim)
    return out_padded[:num_graphs, :out_dim]


# ---------------------------------------------------------------------------
# Glue: dense normalized adjacency (with self loops), mean-pool matrix,
# and one-time padded/bf16 operand prep (hoisted out of the forward path).
# ---------------------------------------------------------------------------
def build_dense_gcn_operators(edge_index, batch, num_nodes, num_graphs):
    src, dst = edge_index[0], edge_index[1]
    A = jnp.zeros((num_nodes, num_nodes), jnp.float32)
    A = A.at[dst, src].set(1.0)                                 # message src -> dst
    A_hat = A + jnp.eye(num_nodes, dtype=jnp.float32)           # self loops
    deg = jnp.sum(A_hat, axis=1)
    dinv = jnp.where(deg > 0, 1.0 / jnp.sqrt(deg), 0.0)
    A_norm = dinv[:, None] * A_hat * dinv[None, :]              # D^-1/2 (A+I) D^-1/2

    one_hot = (batch[None, :] == jnp.arange(num_graphs)[:, None]).astype(jnp.float32)
    counts = jnp.maximum(jnp.sum(one_hot, axis=1, keepdims=True), 1.0)
    P = one_hot / counts                                        # [G, N] mean pool
    return A_norm, P


def prepare_graph_operands(a_norm, pool):
    """Once per graph: precompute PA = P @ A_norm, pad + cast to bf16."""
    n = a_norm.shape[0]
    g = pool.shape[0]
    n_p, _ = _node_padding(n)
    g_p = max(_round_up(g, 16), 16)          # >=16 sublanes for bf16 PA tiles
    pa = jnp.dot(pool, a_norm, precision=jax.lax.Precision.HIGHEST)   # (G, N)
    a_bf = _pad2d(a_norm, n_p, n_p).astype(jnp.bfloat16)
    pa_bf = _pad2d(pa, g_p, n_p).astype(jnp.bfloat16)
    return a_bf, pa_bf


if __name__ == "__main__":
    # synthetic batch of graphs
    NODES_PER_GRAPH = 64
    G = 4
    N = G * NODES_PER_GRAPH          # 256 nodes total
    IN_DIM = 8
    HID = 32
    OUT = 8

    key = jax.random.PRNGKey(0)
    k_x, k_w1, k_b1, k_w2, k_b2, k_wfc, k_bfc = jax.random.split(key, 7)

    x = jax.random.normal(k_x, (N, IN_DIM), jnp.float32)

    # deterministic undirected ring edges inside each graph
    src_list, dst_list = [], []
    for g in range(G):
        base = g * NODES_PER_GRAPH
        for i in range(NODES_PER_GRAPH):
            a, b = base + i, base + (i + 1) % NODES_PER_GRAPH
            src_list += [a, b]
            dst_list += [b, a]
    edge_index = jnp.array([src_list, dst_list], jnp.int32)
    batch = jnp.repeat(jnp.arange(G, dtype=jnp.int32), NODES_PER_GRAPH)

    A_norm, P = build_dense_gcn_operators(edge_index, batch, N, G)
    a_bf, pa_bf = prepare_graph_operands(A_norm, P)   # hoisted, cached per graph

    # deterministic parameters (mirrors GCNConv lin weights + bias, torch Linear W^T)
    w1 = jax.random.normal(k_w1, (IN_DIM, HID), jnp.float32) * 0.1
    b1 = jax.random.normal(k_b1, (1, HID), jnp.float32) * 0.1
    w2 = jax.random.normal(k_w2, (HID, HID), jnp.float32) * 0.1
    b2 = jax.random.normal(k_b2, (1, HID), jnp.float32) * 0.1
    wfc = jax.random.normal(k_wfc, (HID, OUT), jnp.float32) * 0.1
    bfc = jax.random.normal(k_bfc, (1, OUT), jnp.float32) * 0.1

    out = gcn_forward(a_bf, pa_bf, x, w1, b1, w2, b2, wfc, bfc,
                      num_graphs=G, out_dim=OUT)
    out = jax.block_until_ready(out)

    # pure-JAX reference mirroring the bf16-operand / f32-accumulate recipe
    bf = lambda v: v.astype(jnp.bfloat16)
    f32 = jnp.float32
    z1 = jnp.dot(bf(x), bf(w1), preferred_element_type=f32).astype(jnp.bfloat16)
    h1 = jnp.maximum(jnp.dot(bf(A_norm), z1, preferred_element_type=f32) + b1, 0.0)
    z2 = jnp.dot(bf(h1), bf(w2), preferred_element_type=f32)
    pa = jnp.dot(P, A_norm, precision=jax.lax.Precision.HIGHEST)
    pooled = jnp.dot(bf(pa), bf(z2), preferred_element_type=f32) + b2
    logits = jnp.dot(bf(pooled), bf(wfc), preferred_element_type=f32) + bfc
    ref = jax.nn.log_softmax(logits, axis=1)

    assert out.shape == (G, OUT)
    assert bool(jnp.all(jnp.isfinite(out)))
    assert jnp.allclose(out, ref, atol=1e-2, rtol=1e-2)
    print("KERNEL_OK")
</pallas_src>

<mosaic_0001>
module attributes {stable_mosaic.version = 11 : i64} {
  func.func @gcn_fused_kernel(%arg0: i32, %arg1: memref<256x256xbf16, #tpu.memory_space<vmem>>, %arg2: memref<256x128xbf16, #tpu.memory_space<vmem>>, %arg3: memref<16x256xbf16, #tpu.memory_space<vmem>>, %arg4: memref<128x128xbf16, #tpu.memory_space<vmem>>, %arg5: memref<1x128xf32, #tpu.memory_space<vmem>>, %arg6: memref<128x128xbf16, #tpu.memory_space<vmem>>, %arg7: memref<1x128xf32, #tpu.memory_space<vmem>>, %arg8: memref<128x128xbf16, #tpu.memory_space<vmem>>, %arg9: memref<1x128xf32, #tpu.memory_space<vmem>>, %arg10: memref<16x128xf32, #tpu.memory_space<vmem>>, %arg11: memref<256x128xbf16, #tpu.memory_space<vmem>>, %arg12: memref<16x128xf32, #tpu.memory_space<vmem>>) attributes {dimension_semantics = [#tpu.dimension_semantics<arbitrary>], iteration_bounds = array<i64: 1>, scalar_prefetch = 0 : i64, scratch_operands = 2 : i64, tpu.core_type = #tpu.core_type<tc>, window_params = [{transform_indices = @transform_0, window_bounds = array<i64: 256, 256>}, {pipeline_mode = #tpu.pipeline_mode<synchronous>, transform_indices = @transform_1, window_bounds = array<i64: 256, 128>}, {transform_indices = @transform_2, window_bounds = array<i64: 16, 256>}, {pipeline_mode = #tpu.pipeline_mode<synchronous>, transform_indices = @transform_3, window_bounds = array<i64: 128, 128>}, {pipeline_mode = #tpu.pipeline_mode<synchronous>, transform_indices = @transform_4, window_bounds = array<i64: 1, 128>}, {pipeline_mode = #tpu.pipeline_mode<synchronous>, transform_indices = @transform_5, window_bounds = array<i64: 128, 128>}, {pipeline_mode = #tpu.pipeline_mode<synchronous>, transform_indices = @transform_6, window_bounds = array<i64: 1, 128>}, {pipeline_mode = #tpu.pipeline_mode<synchronous>, transform_indices = @transform_7, window_bounds = array<i64: 128, 128>}, {pipeline_mode = #tpu.pipeline_mode<synchronous>, transform_indices = @transform_8, window_bounds = array<i64: 1, 128>}, {pipeline_mode = #tpu.pipeline_mode<synchronous>, transform_indices = @transform_9, window_bounds = array<i64: 16, 128>}]} {
    %c0_i32 = arith.constant 0 : i32
    %0 = arith.cmpi eq, %arg0, %c0_i32 : i32
    %1 = arith.extui %0 : i1 to i32
    %c0_i32_0 = arith.constant 0 : i32
    %2 = arith.cmpi ne, %1, %c0_i32_0 : i32
    scf.if %2 {
      %c0_19 = arith.constant 0 : index
      %c0_20 = arith.constant 0 : index
      %23 = vector.load %arg2[%c0_19, %c0_20] : memref<256x128xbf16, #tpu.memory_space<vmem>>, vector<256x128xbf16>
      %c0_21 = arith.constant 0 : index
      %c0_22 = arith.constant 0 : index
      %24 = vector.load %arg4[%c0_21, %c0_22] : memref<128x128xbf16, #tpu.memory_space<vmem>>, vector<128x128xbf16>
      %cst_23 = arith.constant dense<0.000000e+00> : vector<256x128xf32>
      %25 = tpu.matmul %23, %24, %cst_23 {dimension_numbers = #tpu.dot_dimension_numbers<[1], [0], [0], [1], [0, 0, 1, 1], [], []>} : vector<256x128xbf16>, vector<128x128xbf16>, vector<256x128xf32> -> vector<256x128xf32>
      %26 = arith.truncf %25 : vector<256x128xf32> to vector<256x128xbf16>
      %c0_24 = arith.constant 0 : index
      %c0_25 = arith.constant 0 : index
      %27 = vector.load %arg11[%c0_24, %c0_25] : memref<256x128xbf16, #tpu.memory_space<vmem>>, vector<256x128xbf16>
      tpu.vector_store %arg11[%c0_24, %c0_25], %26 {strides = array<i32>} : memref<256x128xbf16, #tpu.memory_space<vmem>>, vector<256x128xbf16>,
      %cst_26 = arith.constant 0.000000e+00 : f32
      %28 = vector.broadcast %cst_26 : f32 to vector<16x128xf32>
      %c0_27 = arith.constant 0 : index
      %c0_28 = arith.constant 0 : index
      %29 = vector.load %arg12[%c0_27, %c0_28] : memref<16x128xf32, #tpu.memory_space<vmem>>, vector<16x128xf32>
      tpu.vector_store %arg12[%c0_27, %c0_28], %28 {strides = array<i32>} : memref<16x128xf32, #tpu.memory_space<vmem>>, vector<16x128xf32>,
    } else {
    }
    %c0 = arith.constant 0 : index
    %c0_1 = arith.constant 0 : index
    %3 = vector.load %arg1[%c0, %c0_1] : memref<256x256xbf16, #tpu.memory_space<vmem>>, vector<256x256xbf16>
    %c0_2 = arith.constant 0 : index
    %c0_3 = arith.constant 0 : index
    %4 = vector.load %arg11[%c0_2, %c0_3] : memref<256x128xbf16, #tpu.memory_space<vmem>>, vector<256x128xbf16>
    %cst = arith.constant dense<0.000000e+00> : vector<256x128xf32>
    %5 = tpu.matmul %3, %4, %cst {dimension_numbers = #tpu.dot_dimension_numbers<[1], [0], [0], [1], [0, 0, 1, 1], [], []>} : vector<256x256xbf16>, vector<256x128xbf16>, vector<256x128xf32> -> vector<256x128xf32>
    %c0_4 = arith.constant 0 : index
    %c0_5 = arith.constant 0 : index
    %6 = vector.load %arg5[%c0_4, %c0_5] : memref<1x128xf32, #tpu.memory_space<vmem>>, vector<1x128xf32>
    %7 = vector.broadcast %6 : vector<1x128xf32> to vector<256x128xf32>
    %8 = arith.addf %5, %7 : vector<256x128xf32>
    %cst_6 = arith.constant 0.000000e+00 : f32
    %9 = vector.broadcast %cst_6 : f32 to vector<256x128xf32>
    %10 = arith.maximumf %8, %9 : vector<256x128xf32>
    %11 = arith.truncf %10 : vector<256x128xf32> to vector<256x128xbf16>
    %c0_7 = arith.constant 0 : index
    %c0_8 = arith.constant 0 : index
    %12 = vector.load %arg6[%c0_7, %c0_8] : memref<128x128xbf16, #tpu.memory_space<vmem>>, vector<128x128xbf16>
    %cst_9 = arith.constant dense<0.000000e+00> : vector<256x128xf32>
    %13 = tpu.matmul %11, %12, %cst_9 {dimension_numbers = #tpu.dot_dimension_numbers<[1], [0], [0], [1], [0, 0, 1, 1], [], []>} : vector<256x128xbf16>, vector<128x128xbf16>, vector<256x128xf32> -> vector<256x128xf32>
    %c0_10 = arith.constant 0 : index
    %c0_11 = arith.constant 0 : index
    %14 = vector.load %arg12[%c0_10, %c0_11] : memref<16x128xf32, #tpu.memory_space<vmem>>, vector<16x128xf32>
    %c0_12 = arith.constant 0 : index
    %c0_13 = arith.constant 0 : index
    %15 = vector.load %arg3[%c0_12, %c0_13] : memref<16x256xbf16, #tpu.memory_space<vmem>>, vector<16x256xbf16>
    %16 = arith.truncf %13 : vector<256x128xf32> to vector<256x128xbf16>
    %cst_14 = arith.constant dense<0.000000e+00> : vector<16x128xf32>
    %17 = tpu.matmul %15, %16, %cst_14 {dimension_numbers = #tpu.dot_dimension_numbers<[1], [0], [0], [1], [0, 0, 1, 1], [], []>} : vector<16x256xbf16>, vector<256x128xbf16>, vector<16x128xf32> -> vector<16x128xf32>
    %18 = arith.addf %14, %17 : vector<16x128xf32>
    %c0_15 = arith.constant 0 : index
    %c0_16 = arith.constant 0 : index
    %19 = vector.load %arg12[%c0_15, %c0_16] : memref<16x128xf32, #tpu.memory_space<vmem>>, vector<16x128xf32>
    tpu.vector_store %arg12[%c0_15, %c0_16], %18 {strides = array<i32>} : memref<16x128xf32, #tpu.memory_space<vmem>>, vector<16x128xf32>,
    %c0_i32_17 = arith.constant 0 : i32
    %20 = arith.cmpi eq, %arg0, %c0_i32_17 : i32
    %21 = arith.extui %20 : i1 to i32
    %c0_i32_18 = arith.constant 0 : i32
    %22 = arith.cmpi ne, %21, %c0_i32_18 : i32
    scf.if %22 {
      %c0_19 = arith.constant 0 : index
      %c0_20 = arith.constant 0 : index
      %23 = vector.load %arg12[%c0_19, %c0_20] : memref<16x128xf32, #tpu.memory_space<vmem>>, vector<16x128xf32>
      %c0_21 = arith.constant 0 : index
      %c0_22 = arith.constant 0 : index
      %24 = vector.load %arg7[%c0_21, %c0_22] : memref<1x128xf32, #tpu.memory_space<vmem>>, vector<1x128xf32>
      %25 = vector.broadcast %24 : vector<1x128xf32> to vector<16x128xf32>
      %26 = arith.addf %23, %25 : vector<16x128xf32>
      %27 = arith.truncf %26 : vector<16x128xf32> to vector<16x128xbf16>
      %c0_23 = arith.constant 0 : index
      %c0_24 = arith.constant 0 : index
      %28 = vector.load %arg8[%c0_23, %c0_24] : memref<128x128xbf16, #tpu.memory_space<vmem>>, vector<128x128xbf16>
      %cst_25 = arith.constant dense<0.000000e+00> : vector<16x128xf32>
      %29 = tpu.matmul %27, %28, %cst_25 {dimension_numbers = #tpu.dot_dimension_numbers<[1], [0], [0], [1], [0, 0, 1, 1], [], []>} : vector<16x128xbf16>, vector<128x128xbf16>, vector<16x128xf32> -> vector<16x128xf32>
      %c0_26 = arith.constant 0 : index
      %c0_27 = arith.constant 0 : index
      %30 = vector.load %arg9[%c0_26, %c0_27] : memref<1x128xf32, #tpu.memory_space<vmem>>, vector<1x128xf32>
      %31 = vector.broadcast %30 : vector<1x128xf32> to vector<16x128xf32>
      %32 = arith.addf %29, %31 : vector<16x128xf32>
      %33 = tpu.iota {dimensions = array<i32: 1>} : vector<16x128xi32>
      %c8_i32 = arith.constant 8 : i32
      %34 = vector.broadcast %c8_i32 : i32 to vector<16x128xi32>
      %35 = arith.cmpi slt, %33, %34 : vector<16x128xi32>
      %cst_28 = arith.constant -1.000000e+30 : f32
      %36 = vector.broadcast %cst_28 : f32 to vector<16x128xf32>
      %37 = arith.select %35, %32, %36 : vector<16x128xi1>, vector<16x128xf32>
      %cst_29 = arith.constant dense<0xFF800000> : vector<16xf32>
      %38 = vector.multi_reduction <maximumf>, %37, %cst_29 [1] : vector<16x128xf32> to vector<16xf32>
      %39 = vector.shape_cast %38 : vector<16xf32> to vector<16x1xf32>
      %40 = vector.broadcast %39 : vector<16x1xf32> to vector<16x128xf32>
      %41 = arith.subf %37, %40 : vector<16x128xf32>
      %42 = math.exp %41 : vector<16x128xf32>
      %cst_30 = arith.constant 0.000000e+00 : f32
      %43 = vector.broadcast %cst_30 : f32 to vector<16x128xf32>
      %44 = arith.select %35, %42, %43 : vector<16x128xi1>, vector<16x128xf32>
      %cst_31 = arith.constant dense<0.000000e+00> : vector<16xf32>
      %45 = vector.multi_reduction <add>, %44, %cst_31 [1] : vector<16x128xf32> to vector<16xf32>
      %46 = vector.shape_cast %45 : vector<16xf32> to vector<16x1xf32>
      %47 = math.log %46 : vector<16x1xf32>
      %48 = vector.broadcast %47 : vector<16x1xf32> to vector<16x128xf32>
      %49 = arith.subf %41, %48 : vector<16x128xf32>
      %c0_32 = arith.constant 0 : index
      %c0_33 = arith.constant 0 : index
      %50 = vector.load %arg10[%c0_32, %c0_33] : memref<16x128xf32, #tpu.memory_space<vmem>>, vector<16x128xf32>
      tpu.vector_store %arg10[%c0_32, %c0_33], %49 {strides = array<i32>} : memref<16x128xf32, #tpu.memory_space<vmem>>, vector<16x128xf32>,
    } else {
    }
    return
  }
  func.func @transform_0(%arg0: i32) -> (i32, i32) {
    %c0_i32 = arith.constant 0 : i32
    %c0_i32_0 = arith.constant 0 : i32
    return %arg0, %c0_i32 : i32, i32
  }
  func.func @transform_1(%arg0: i32) -> (i32, i32) {
    %c0_i32 = arith.constant 0 : i32
    %c0_i32_0 = arith.constant 0 : i32
    %c0_i32_1 = arith.constant 0 : i32
    return %c0_i32, %c0_i32_0 : i32, i32
  }
  func.func @transform_2(%arg0: i32) -> (i32, i32) {
    %c0_i32 = arith.constant 0 : i32
    %c0_i32_0 = arith.constant 0 : i32
    return %c0_i32, %arg0 : i32, i32
  }
  func.func @transform_3(%arg0: i32) -> (i32, i32) {
    %c0_i32 = arith.constant 0 : i32
    %c0_i32_0 = arith.constant 0 : i32
    %c0_i32_1 = arith.constant 0 : i32
    return %c0_i32, %c0_i32_0 : i32, i32
  }
  func.func @transform_4(%arg0: i32) -> (i32, i32) {
    %c0_i32 = arith.constant 0 : i32
    %c0_i32_0 = arith.constant 0 : i32
    %c0_i32_1 = arith.constant 0 : i32
    return %c0_i32, %c0_i32_0 : i32, i32
  }
  func.func @transform_5(%arg0: i32) -> (i32, i32) {
    %c0_i32 = arith.constant 0 : i32
    %c0_i32_0 = arith.constant 0 : i32
    %c0_i32_1 = arith.constant 0 : i32
    return %c0_i32, %c0_i32_0 : i32, i32
  }
  func.func @transform_6(%arg0: i32) -> (i32, i32) {
    %c0_i32 = arith.constant 0 : i32
    %c0_i32_0 = arith.constant 0 : i32
    %c0_i32_1 = arith.constant 0 : i32
    return %c0_i32, %c0_i32_0 : i32, i32
  }
  func.func @transform_7(%arg0: i32) -> (i32, i32) {
    %c0_i32 = arith.constant 0 : i32
    %c0_i32_0 = arith.constant 0 : i32
    %c0_i32_1 = arith.constant 0 : i32
    return %c0_i32, %c0_i32_0 : i32, i32
  }
  func.func @transform_8(%arg0: i32) -> (i32, i32) {
    %c0_i32 = arith.constant 0 : i32
    %c0_i32_0 = arith.constant 0 : i32
    %c0_i32_1 = arith.constant 0 : i32
    return %c0_i32, %c0_i32_0 : i32, i32
  }
  func.func @transform_9(%arg0: i32) -> (i32, i32) {
    %c0_i32 = arith.constant 0 : i32
    %c0_i32_0 = arith.constant 0 : i32
    %c0_i32_1 = arith.constant 0 : i32
    return %c0_i32, %c0_i32_0 : i32, i32
  }
}

</mosaic_0001>

<llo_original>
// kernel: gcn_forward.1
$region0: #{gcn_forward.1}
  #allocation0 [shape = 'u32[]', space=smem, size = 0x4, offset = 0x4, fixed_abs, tag = 'smem constant byte address 0x4 - core index']
  #allocation1 [shape = 'u32[144,128]{1,0:T(1,128)}', space=vmem, size = 0x12000, scoped, tag = 'internal scratch']
  #allocation2 [shape = 'bf16[256,128]{1,0:T(16,128)(2,1)}', space=vmem, size = 0x10000, scoped, tag = 'scratch operand']
  #allocation3 [shape = 'f32[16,128]{1,0:T(8,128)}', space=vmem, size = 0x2000, scoped, tag = 'scratch operand']
  %s0 = inlined_call_operand.vmem [shape: bf16[256,256], index: 0, kind: input, shape index: {}]
  %s1 = inlined_call_operand.vmem [shape: bf16[256,128], index: 1, kind: input, shape index: {}]
  %s2 = inlined_call_operand.vmem [shape: bf16[16,256], index: 2, kind: input, shape index: {}]
  %s3 = inlined_call_operand.vmem [shape: bf16[128,128], index: 3, kind: input, shape index: {}]
  %s4 = inlined_call_operand.vmem [shape: f32[1,128], index: 4, kind: input, shape index: {}]
  %s5 = inlined_call_operand.vmem [shape: bf16[128,128], index: 5, kind: input, shape index: {}]
  %s6 = inlined_call_operand.vmem [shape: f32[1,128], index: 6, kind: input, shape index: {}]
  %s7 = inlined_call_operand.vmem [shape: bf16[128,128], index: 7, kind: input, shape index: {}]
  %s8 = inlined_call_operand.vmem [shape: f32[1,128], index: 8, kind: input, shape index: {}]
  %s9 = inlined_call_operand.vmem [shape: f32[16,128], index: 9, kind: output, shape index: {}]
  %s10 = sld [smem:[#allocation0]]
  $region54: #{gcn_forward.1} parent=0
    _
  %s12 = ssub.s32 1, %s10
  %s13 = scalar_select 0, %s12, %s10
  // Predicated region
  $region2: #{gcn_forward.1} parent=0 // pred_check
    _
  $region3: #{gcn_forward.1} parent=0 // pred_check_branch
    %15 = sbr.rel (0) target = $region5
  $region4: #{gcn_forward.1} parent=0 // pred_region
    _
  $region5: #{gcn_forward.1} parent=0 // pred_fallthru
    _
  // Predicated region
  $region6: #{gcn_forward.1} parent=0 // pred_check
    _
  $region7: #{gcn_forward.1} parent=0 // pred_check_branch
    %17 = sbr.rel (0) target = $region9
  $region8: #{gcn_forward.1} parent=0 // pred_region
    _
  $region9: #{gcn_forward.1} parent=0 // pred_fallthru
    _
  // Predicated region
  $region10: #{gcn_forward.1} parent=0 // pred_check
    _
  $region11: #{gcn_forward.1} parent=0 // pred_check_branch
    %19 = sbr.rel (0) target = $region13
  $region12: #{gcn_forward.1} parent=0 // pred_region
    _
  $region13: #{gcn_forward.1} parent=0 // pred_fallthru
    _
  // Predicated region
  $region14: #{gcn_forward.1} parent=0 // pred_check
    _
  $region15: #{gcn_forward.1} parent=0 // pred_check_branch
    %21 = sbr.rel (0) target = $region17
  $region16: #{gcn_forward.1} parent=0 // pred_region
    _
  $region17: #{gcn_forward.1} parent=0 // pred_fallthru
    _
  // Predicated region
  $region18: #{gcn_forward.1} parent=0 // pred_check
    _
  $region19: #{gcn_forward.1} parent=0 // pred_check_branch
    %23 = sbr.rel (0) target = $region21
  $region20: #{gcn_forward.1} parent=0 // pred_region
    _
  $region21: #{gcn_forward.1} parent=0 // pred_fallthru
    _
  // Predicated region
  $region22: #{gcn_forward.1} parent=0 // pred_check
    _
  $region23: #{gcn_forward.1} parent=0 // pred_check_branch
    %25 = sbr.rel (0) target = $region25
  $region24: #{gcn_forward.1} parent=0 // pred_region
    _
  $region25: #{gcn_forward.1} parent=0 // pred_fallthru
    _
  // Predicated region
  $region26: #{gcn_forward.1} parent=0 // pred_check
    _
  $region27: #{gcn_forward.1} parent=0 // pred_check_branch
    %27 = sbr.rel (0) target = $region29
  $region28: #{gcn_forward.1} parent=0 // pred_region
    _
  $region29: #{gcn_forward.1} parent=0 // pred_fallthru
    _
  // Predicated region
  $region30: #{gcn_forward.1} parent=0 // pred_check
    _
  $region31: #{gcn_forward.1} parent=0 // pred_check_branch
    %29 = sbr.rel (0) target = $region33
  $region32: #{gcn_forward.1} parent=0 // pred_region
    _
  $region33: #{gcn_forward.1} parent=0 // pred_fallthru
    _
  // Predicated region
  $region34: #{gcn_forward.1} parent=0 // pred_check
    _
  $region35: #{gcn_forward.1} parent=0 // pred_check_branch
    %31 = sbr.rel (0) target = $region37
  $region36: #{gcn_forward.1} parent=0 // pred_region
    _
  $region37: #{gcn_forward.1} parent=0 // pred_fallthru
    _
  %p33 = scmp.eq.s32.totalorder 0, 0
  // Predicated region
  $region38: #{gcn_forward.1} parent=0 // pred_check
    %p34 = pneg %p33
  $region39: #{gcn_forward.1} parent=0 // pred_check_branch
    %36 = sbr.rel (%p34) target = $region41
  $region40: #{gcn_forward.1} parent=0 // pred_region
    %v37 = vld [vmem:[%s1] sm:$0xf]
    %v38 = vld [vmem:[%s1 + $0x4] sm:$0xf]
    %v39 = vld [vmem:[%s1 + $0x8] sm:$0xf]
    %v40 = vld [vmem:[%s1 + $0xc] sm:$0xf]
    %v41 = vld [vmem:[%s1 + $0x10] sm:$0xf]
    %v42 = vld [vmem:[%s1 + $0x14] sm:$0xf]
    %v43 = vld [vmem:[%s1 + $0x18] sm:$0xf]
    %v44 = vld [vmem:[%s1 + $0x1c] sm:$0xf]
    %v45 = vld [vmem:[%s1 + $0x20] sm:$0xf]
    %v46 = vld [vmem:[%s1 + $0x24] sm:$0xf]
    %v47 = vld [vmem:[%s1 + $0x28] sm:$0xf]
    %v48 = vld [vmem:[%s1 + $0x2c] sm:$0xf]
    %v49 = vld [vmem:[%s1 + $0x30] sm:$0xf]
    %v50 = vld [vmem:[%s1 + $0x34] sm:$0xf]
    %v51 = vld [vmem:[%s1 + $0x38] sm:$0xf]
    %v52 = vld [vmem:[%s1 + $0x3c] sm:$0xf]
    %v53 = vld [vmem:[%s1 + $0x40] sm:$0xf]
    %v54 = vld [vmem:[%s1 + $0x44] sm:$0xf]
    %v55 = vld [vmem:[%s1 + $0x48] sm:$0xf]
    %v56 = vld [vmem:[%s1 + $0x4c] sm:$0xf]
    %v57 = vld [vmem:[%s1 + $0x50] sm:$0xf]
    %v58 = vld [vmem:[%s1 + $0x54] sm:$0xf]
    %v59 = vld [vmem:[%s1 + $0x58] sm:$0xf]
    %v60 = vld [vmem:[%s1 + $0x5c] sm:$0xf]
    %v61 = vld [vmem:[%s1 + $0x60] sm:$0xf]
    %v62 = vld [vmem:[%s1 + $0x64] sm:$0xf]
    %v63 = vld [vmem:[%s1 + $0x68] sm:$0xf]
    %v64 = vld [vmem:[%s1 + $0x6c] sm:$0xf]
    %v65 = vld [vmem:[%s1 + $0x70] sm:$0xf]
    %v66 = vld [vmem:[%s1 + $0x74] sm:$0xf]
    %v67 = vld [vmem:[%s1 + $0x78] sm:$0xf]
    %v68 = vld [vmem:[%s1 + $0x7c] sm:$0xf]
    %v69 = vld [vmem:[%s3] sm:$0xf]
    %v70 = vld [vmem:[%s3 + $0x4] sm:$0xf]
    %v71 = vld [vmem:[%s3 + $0x8] sm:$0xf]
    %v72 = vld [vmem:[%s3 + $0xc] sm:$0xf]
    %v73 = vld [vmem:[%s3 + $0x10] sm:$0xf]
    %v74 = vld [vmem:[%s3 + $0x14] sm:$0xf]
    %v75 = vld [vmem:[%s3 + $0x18] sm:$0xf]
    %v76 = vld [vmem:[%s3 + $0x1c] sm:$0xf]
    %v77 = vld [vmem:[%s3 + $0x20] sm:$0xf]
    %v78 = vld [vmem:[%s3 + $0x24] sm:$0xf]
    %v79 = vld [vmem:[%s3 + $0x28] sm:$0xf]
    %v80 = vld [vmem:[%s3 + $0x2c] sm:$0xf]
    %v81 = vld [vmem:[%s3 + $0x30] sm:$0xf]
    %v82 = vld [vmem:[%s3 + $0x34] sm:$0xf]
    %v83 = vld [vmem:[%s3 + $0x38] sm:$0xf]
    %v84 = vld [vmem:[%s3 + $0x3c] sm:$0xf]
    %v117 = vunpack.c.l.b16 %v37
    %v118 = vunpack.c.l.b16 %v38
    %v119 = vunpack.c.l.b16 %v39
    %v120 = vunpack.c.l.b16 %v40
    %v121 = vunpack.c.l.b16 %v41
    %v122 = vunpack.c.l.b16 %v42
    %v123 = vunpack.c.l.b16 %v43
    %v124 = vunpack.c.l.b16 %v44
    %v125 = vunpack.c.l.b16 %v45
    %v126 = vunpack.c.l.b16 %v46
    %v127 = vunpack.c.l.b16 %v47
    %v128 = vunpack.c.l.b16 %v48
    %v129 = vunpack.c.l.b16 %v49
    %v130 = vunpack.c.l.b16 %v50
    %v131 = vunpack.c.l.b16 %v51
    %v132 = vunpack.c.l.b16 %v52
    %v133 = vunpack.c.l.b16 %v53
    %v134 = vunpack.c.l.b16 %v54
    %v135 = vunpack.c.l.b16 %v55
    %v136 = vunpack.c.l.b16 %v56
    %v137 = vunpack.c.l.b16 %v57
    %v138 = vunpack.c.l.b16 %v58
    %v139 = vunpack.c.l.b16 %v59
    %v140 = vunpack.c.l.b16 %v60
    %v141 = vunpack.c.l.b16 %v61
    %v142 = vunpack.c.l.b16 %v62
    %v143 = vunpack.c.l.b16 %v63
    %v144 = vunpack.c.l.b16 %v64
    %v145 = vunpack.c.l.b16 %v65
    %v146 = vunpack.c.l.b16 %v66
    %v147 = vunpack.c.l.b16 %v67
    %v148 = vunpack.c.l.b16 %v68
    %v149 = vpack.c.b16 %v118, %v117
    %v150 = vpack.c.b16 %v120, %v119
    %v151 = vpack.c.b16 %v122, %v121
    %v152 = vpack.c.b16 %v124, %v123
    %v153 = vpack.c.b16 %v126, %v125
    %v154 = vpack.c.b16 %v128, %v127
    %v155 = vpack.c.b16 %v130, %v129
    %v156 = vpack.c.b16 %v132, %v131
    %v157 = vpack.c.b16 %v134, %v133
    %v158 = vpack.c.b16 %v136, %v135
    %v159 = vpack.c.b16 %v138, %v137
    %v160 = vpack.c.b16 %v140, %v139
    %v161 = vpack.c.b16 %v142, %v141
    %v162 = vpack.c.b16 %v144, %v143
    %v163 = vpack.c.b16 %v146, %v145
    %v164 = vpack.c.b16 %v148, %v147
    %v197 = vunpack.c.l.b16 %v69
    %v198 = vunpack.c.l.b16 %v70
    %v199 = vunpack.c.l.b16 %v71
    %v200 = vunpack.c.l.b16 %v72
    %v201 = vunpack.c.l.b16 %v73
    %v202 = vunpack.c.l.b16 %v74
    %v203 = vunpack.c.l.b16 %v75
    %v204 = vunpack.c.l.b16 %v76
    %v205 = vunpack.c.l.b16 %v77
    %v206 = vunpack.c.l.b16 %v78
    %v207 = vunpack.c.l.b16 %v79
    %v208 = vunpack.c.l.b16 %v80
    %v209 = vunpack.c.l.b16 %v81
    %v210 = vunpack.c.l.b16 %v82
    %v211 = vunpack.c.l.b16 %v83
    %v212 = vunpack.c.l.b16 %v84
    %v213 = vpack.c.b16 %v198, %v197
    %v214 = vpack.c.b16 %v200, %v199
    %v215 = vpack.c.b16 %v202, %v201
    %v216 = vpack.c.b16 %v204, %v203
    %v217 = vpack.c.b16 %v206, %v205
    %v218 = vpack.c.b16 %v208, %v207
    %v219 = vpack.c.b16 %v210, %v209
    %v220 = vpack.c.b16 %v212, %v211
    %229 = vmatprep.subr.bf16.mxu0 0
    %230 = vmatpush1.bf16.msra.mxu0 %v213
    %231 = vmatprep.subr.bf16.mxu0 0
    %232 = vmatpush1.bf16.msra.mxu0 %v214
    %233 = vmatprep.subr.bf16.mxu0 0
    %234 = vmatpush1.bf16.msra.mxu0 %v215
    %235 = vmatprep.subr.bf16.mxu0 0
    %236 = vmatpush1.bf16.msra.mxu0 %v216
    %237 = vmatprep.subr.bf16.mxu0 0
    %238 = vmatpush1.bf16.msra.mxu0 %v217
    %239 = vmatprep.subr.bf16.mxu0 0
    %240 = vmatpush1.bf16.msra.mxu0 %v218
    %241 = vmatprep.subr.bf16.mxu0 0
    %242 = vmatpush1.bf16.msra.mxu0 %v219
    %243 = vmatprep.subr.bf16.mxu0 0
    %244 = vmatpush1.bf16.msra.mxu0 %v220
    %245 = vmatprep.subr.bf16.mxu0 0
    %246 = vmatpush1.bf16.msra.mxu0 0
    %247 = vmatprep.subr.bf16.mxu0 0
    %248 = vmatpush1.bf16.msra.mxu0 0
    %249 = vmatprep.subr.bf16.mxu0 0
    %250 = vmatpush1.bf16.msra.mxu0 0
    %251 = vmatprep.subr.bf16.mxu0 0
    %252 = vmatpush1.bf16.msra.mxu0 0
    %253 = vmatprep.subr.bf16.mxu0 0
    %254 = vmatpush1.bf16.msra.mxu0 0
    %255 = vmatprep.subr.bf16.mxu0 0
    %256 = vmatpush1.bf16.msra.mxu0 0
    %257 = vmatprep.subr.bf16.mxu0 0
    %258 = vmatpush1.bf16.msra.mxu0 0
    %259 = vmatprep.subr.bf16.mxu0 0
    %260 = vmatpush1.bf16.msra.mxu0 0
    %261 = vmatprep.mubr.bf16.mxu0 0
    %262 = vmatmul.mubr.bf16.gmra.mrb[0].mxu0 %v149
    %v263 = vpop.f32.mrb[0].mxu0
    %v264 = vadd.f32 0.0, %v263
    %v265 = vpop.f32.mrb[0].mxu0
    %v266 = vpop.f32.mrb[0].mxu0
    %v267 = vadd.f32 0.0, %v266
    %v268 = vpop.f32.mrb[0].mxu0
    %269 = vmatprep.mubr.bf16.mxu0 0
    %270 = vmatmul.mubr.bf16.gmra.mrb[0].mxu0 %v150
    %v271 = vpop.f32.mrb[0].mxu0
    %v272 = vadd.f32 0.0, %v271
    %v273 = vpop.f32.mrb[0].mxu0
    %v274 = vpop.f32.mrb[0].mxu0
    %v275 = vadd.f32 0.0, %v274
    %v276 = vpop.f32.mrb[0].mxu0
    %277 = vmatprep.mubr.bf16.mxu0 0
    %278 = vmatmul.mubr.bf16.gmra.mrb[0].mxu0 %v151
    %v279 = vpop.f32.mrb[0].mxu0
    %v280 = vadd.f32 0.0, %v279
    %v281 = vpop.f32.mrb[0].mxu0
    %v282 = vpop.f32.mrb[0].mxu0
    %v283 = vadd.f32 0.0, %v282
    %v284 = vpop.f32.mrb[0].mxu0
    %285 = vmatprep.mubr.bf16.mxu0 0
    %286 = vmatmul.mubr.bf16.gmra.mrb[0].mxu0 %v152
    %v287 = vpop.f32.mrb[0].mxu0
    %v288 = vadd.f32 0.0, %v287
    %v289 = vpop.f32.mrb[0].mxu0
    %v290 = vpop.f32.mrb[0].mxu0
    %v291 = vadd.f32 0.0, %v290
    %v292 = vpop.f32.mrb[0].mxu0
    %293 = vmatprep.mubr.bf16.mxu0 0
    %294 = vmatmul.mubr.bf16.gmra.mrb[0].mxu0 %v153
    %v295 = vpop.f32.mrb[0].mxu0
    %v296 = vadd.f32 0.0, %v295
    %v297 = vpop.f32.mrb[0].mxu0
    %v298 = vpop.f32.mrb[0].mxu0
    %v299 = vadd.f32 0.0, %v298
    %v300 = vpop.f32.mrb[0].mxu0
    %301 = vmatprep.mubr.bf16.mxu0 0
    %302 = vmatmul.mubr.bf16.gmra.mrb[0].mxu0 %v154
    %v303 = vpop.f32.mrb[0].mxu0
    %v304 = vadd.f32 0.0, %v303
    %v305 = vpop.f32.mrb[0].mxu0
    %v306 = vpop.f32.mrb[0].mxu0
    %v307 = vadd.f32 0.0, %v306
    %v308 = vpop.f32.mrb[0].mxu0
    %309 = vmatprep.mubr.bf16.mxu0 0
    %310 = vmatmul.mubr.bf16.gmra.mrb[0].mxu0 %v155
    %v311 = vpop.f32.mrb[0].mxu0
    %v312 = vadd.f32 0.0, %v311
    %v313 = vpop.f32.mrb[0].mxu0
    %v314 = vpop.f32.mrb[0].mxu0
    %v315 = vadd.f32 0.0, %v314
    %v316 = vpop.f32.mrb[0].mxu0
    %317 = vmatprep.mubr.bf16.mxu0 0
    %318 = vmatmul.mubr.bf16.gmra.mrb[0].mxu0 %v156
    %v319 = vpop.f32.mrb[0].mxu0
    %v320 = vadd.f32 0.0, %v319
    %v321 = vpop.f32.mrb[0].mxu0
    %v322 = vpop.f32.mrb[0].mxu0
    %v323 = vadd.f32 0.0, %v322
    %v324 = vpop.f32.mrb[0].mxu0
    %325 = vmatprep.mubr.bf16.mxu0 0
    %326 = vmatmul.mubr.bf16.gmra.mrb[0].mxu0 %v157
    %v327 = vpop.f32.mrb[0].mxu0
    %v328 = vadd.f32 0.0, %v327
    %v329 = vpop.f32.mrb[0].mxu0
    %v330 = vpop.f32.mrb[0].mxu0
    %v331 = vadd.f32 0.0, %v330
    %v332 = vpop.f32.mrb[0].mxu0
    %333 = vmatprep.mubr.bf16.mxu0 0
    %334 = vmatmul.mubr.bf16.gmra.mrb[0].mxu0 %v158
    %v335 = vpop.f32.mrb[0].mxu0
    %v336 = vadd.f32 0.0, %v335
    %v337 = vpop.f32.mrb[0].mxu0
    %v338 = vpop.f32.mrb[0].mxu0
    %v339 = vadd.f32 0.0, %v338
    %v340 = vpop.f32.mrb[0].mxu0
    %341 = vmatprep.mubr.bf16.mxu0 0
    %342 = vmatmul.mubr.bf16.gmra.mrb[0].mxu0 %v159
    %v343 = vpop.f32.mrb[0].mxu0
    %v344 = vadd.f32 0.0, %v343
    %v345 = vpop.f32.mrb[0].mxu0
    %v346 = vpop.f32.mrb[0].mxu0
    %v347 = vadd.f32 0.0, %v346
    %v348 = vpop.f32.mrb[0].mxu0
    %349 = vmatprep.mubr.bf16.mxu0 0
    %350 = vmatmul.mubr.bf16.gmra.mrb[0].mxu0 %v160
    %v351 = vpop.f32.mrb[0].mxu0
    %v352 = vadd.f32 0.0, %v351
    %v353 = vpop.f32.mrb[0].mxu0
    %v354 = vpop.f32.mrb[0].mxu0
    %v355 = vadd.f32 0.0, %v354
    %v356 = vpop.f32.mrb[0].mxu0
    %357 = vmatprep.mubr.bf16.mxu0 0
    %358 = vmatmul.mubr.bf16.gmra.mrb[0].mxu0 %v161
    %v359 = vpop.f32.mrb[0].mxu0
    %v360 = vadd.f32 0.0, %v359
    %v361 = vpop.f32.mrb[0].mxu0
    %v362 = vpop.f32.mrb[0].mxu0
    %v363 = vadd.f32 0.0, %v362
    %v364 = vpop.f32.mrb[0].mxu0
    %365 = vmatprep.mubr.bf16.mxu0 0
    %366 = vmatmul.mubr.bf16.gmra.mrb[0].mxu0 %v162
    %v367 = vpop.f32.mrb[0].mxu0
    %v368 = vadd.f32 0.0, %v367
    %v369 = vpop.f32.mrb[0].mxu0
    %v370 = vpop.f32.mrb[0].mxu0
    %v371 = vadd.f32 0.0, %v370
    %v372 = vpop.f32.mrb[0].mxu0
    %373 = vmatprep.mubr.bf16.mxu0 0
    %374 = vmatmul.mubr.bf16.gmra.mrb[0].mxu0 %v163
    %v375 = vpop.f32.mrb[0].mxu0
    %v376 = vadd.f32 0.0, %v375
    %v377 = vpop.f32.mrb[0].mxu0
    %v378 = vpop.f32.mrb[0].mxu0
    %v379 = vadd.f32 0.0, %v378
    %v380 = vpop.f32.mrb[0].mxu0
    %381 = vmatprep.mubr.bf16.mxu0 0
    %382 = vmatmul.mubr.bf16.gmra.mrb[0].mxu0 %v164
    %v383 = vpop.f32.mrb[0].mxu0
    %v384 = vadd.f32 0.0, %v383
    %v385 = vpop.f32.mrb[0].mxu0
    %v386 = vpop.f32.mrb[0].mxu0
    %v387 = vadd.f32 0.0, %v386
    %v388 = vpop.f32.mrb[0].mxu0
    %389 = vdwg.mxu0
    %v390 = vpack.c.bf16 %v267, %v264
    %v391 = vpack.c.bf16 %v275, %v272
    %v392 = vpack.c.bf16 %v283, %v280
    %v393 = vpack.c.bf16 %v291, %v288
    %v394 = vpack.c.bf16 %v299, %v296
    %v395 = vpack.c.bf16 %v307, %v304
    %v396 = vpack.c.bf16 %v315, %v312
    %v397 = vpack.c.bf16 %v323, %v320
    %v398 = vpack.c.bf16 %v331, %v328
    %v399 = vpack.c.bf16 %v339, %v336
    %v400 = vpack.c.bf16 %v347, %v344
    %v401 = vpack.c.bf16 %v355, %v352
    %v402 = vpack.c.bf16 %v363, %v360
    %v403 = vpack.c.bf16 %v371, %v368
    %v404 = vpack.c.bf16 %v379, %v376
    %v405 = vpack.c.bf16 %v387, %v384
    %406 = vst [vmem:[#allocation2] sm:$0xff] %v390
    %407 = vst [vmem:[#allocation2 + $0x8] sm:$0xff] %v391
    %408 = vst [vmem:[#allocation2 + $0x10] sm:$0xff] %v392
    %409 = vst [vmem:[#allocation2 + $0x18] sm:$0xff] %v393
    %410 = vst [vmem:[#allocation2 + $0x20] sm:$0xff] %v394
    %411 = vst [vmem:[#allocation2 + $0x28] sm:$0xff] %v395
    %412 = vst [vmem:[#allocation2 + $0x30] sm:$0xff] %v396
    %413 = vst [vmem:[#allocation2 + $0x38] sm:$0xff] %v397
    %414 = vst [vmem:[#allocation2 + $0x40] sm:$0xff] %v398
    %415 = vst [vmem:[#allocation2 + $0x48] sm:$0xff] %v399
    %416 = vst [vmem:[#allocation2 + $0x50] sm:$0xff] %v400
    %417 = vst [vmem:[#allocation2 + $0x58] sm:$0xff] %v401
    %418 = vst [vmem:[#allocation2 + $0x60] sm:$0xff] %v402
    %419 = vst [vmem:[#allocation2 + $0x68] sm:$0xff] %v403
    %420 = vst [vmem:[#allocation2 + $0x70] sm:$0xff] %v404
    %421 = vst [vmem:[#allocation2 + $0x78] sm:$0xff] %v405
    %422 = vst [vmem:[#allocation3] sm:$0xff] 0.0
    %423 = vst [vmem:[#allocation3 + $0x8] sm:$0xff] 0.0
  $region41: #{gcn_forward.1} parent=0 // pred_fallthru
    _
  %v424 = vld [vmem:[%s0] sm:$0xff]
  %v425 = vld [vmem:[%s0 + $0x8] sm:$0xff]
  %v426 = vld [vmem:[%s0 + $0x10] sm:$0xff]
  %v427 = vld [vmem:[%s0 + $0x18] sm:$0xff]
  %v428 = vld [vmem:[%s0 + $0x20] sm:$0xff]
  %v429 = vld [vmem:[%s0 + $0x28] sm:$0xff]
  %v430 = vld [vmem:[%s0 + $0x30] sm:$0xff]
  %v431 = vld [vmem:[%s0 + $0x38] sm:$0xff]
  %v432 = vld [vmem:[%s0 + $0x40] sm:$0xff]
  %v433 = vld [vmem:[%s0 + $0x48] sm:$0xff]
  %v434 = vld [vmem:[%s0 + $0x50] sm:$0xff]
  %v435 = vld [vmem:[%s0 + $0x58] sm:$0xff]
  %v436 = vld [vmem:[%s0 + $0x60] sm:$0xff]
  %v437 = vld [vmem:[%s0 + $0x68] sm:$0xff]
  %v438 = vld [vmem:[%s0 + $0x70] sm:$0xff]
  %v439 = vld [vmem:[%s0 + $0x78] sm:$0xff]
  %v440 = vld [vmem:[%s0 + $0x80] sm:$0xff]
  %v441 = vld [vmem:[%s0 + $0x88] sm:$0xff]
  %v442 = vld [vmem:[%s0 + $0x90] sm:$0xff]
  %v443 = vld [vmem:[%s0 + $0x98] sm:$0xff]
  %v444 = vld [vmem:[%s0 + $0xa0] sm:$0xff]
  %v445 = vld [vmem:[%s0 + $0xa8] sm:$0xff]
  %v446 = vld [vmem:[%s0 + $0xb0] sm:$0xff]
  %v447 = vld [vmem:[%s0 + $0xb8] sm:$0xff]
  %v448 = vld [vmem:[%s0 + $0xc0] sm:$0xff]
  %v449 = vld [vmem:[%s0 + $0xc8] sm:$0xff]
  %v450 = vld [vmem:[%s0 + $0xd0] sm:$0xff]
  %v451 = vld [vmem:[%s0 + $0xd8] sm:$0xff]
  %v452 = vld [vmem:[%s0 + $0xe0] sm:$0xff]
  %v453 = vld [vmem:[%s0 + $0xe8] sm:$0xff]
  %v454 = vld [vmem:[%s0 + $0xf0] sm:$0xff]
  %v455 = vld [vmem:[%s0 + $0xf8] sm:$0xff]
  %v456 = vld [vmem:[#allocation2] sm:$0xff]
  %v457 = vld [vmem:[#allocation2 + $0x8] sm:$0xff]
  %v458 = vld [vmem:[#allocation2 + $0x10] sm:$0xff]
  %v459 = vld [vmem:[#allocation2 + $0x18] sm:$0xff]
  %v460 = vld [vmem:[#allocation2 + $0x20] sm:$0xff]
  %v461 = vld [vmem:[#allocation2 + $0x28] sm:$0xff]
  %v462 = vld [vmem:[#allocation2 + $0x30] sm:$0xff]
  %v463 = vld [vmem:[#allocation2 + $0x38] sm:$0xff]
  %v464 = vld [vmem:[#allocation2 + $0x40] sm:$0xff]
  %v465 = vld [vmem:[#allocation2 + $0x48] sm:$0xff]
  %v466 = vld [vmem:[#allocation2 + $0x50] sm:$0xff]
  %v467 = vld [vmem:[#allocation2 + $0x58] sm:$0xff]
  %v468 = vld [vmem:[#allocation2 + $0x60] sm:$0xff]
  %v469 = vld [vmem:[#allocation2 + $0x68] sm:$0xff]
  %v470 = vld [vmem:[#allocation2 + $0x70] sm:$0xff]
  %v471 = vld [vmem:[#allocation2 + $0x78] sm:$0xff]
  %v472 = vld [vmem:[%s4] sm:$0x1]
  %v474 = vlaneseq
  %v475 = vshrl.u32 %v474, 7
  %v476 = vsub.s32 0, %v475
  %v477 = vrot.slane %v472, %v476
  %v511 = vunpack.c.l.b16 %v424
  %v512 = vunpack.c.h.b16 %v424
  %v513 = vunpack.c.l.b16 %v425
  %v514 = vunpack.c.h.b16 %v425
  %v515 = vunpack.c.l.b16 %v426
  %v516 = vunpack.c.h.b16 %v426
  %v517 = vunpack.c.l.b16 %v427
  %v518 = vunpack.c.h.b16 %v427
  %v519 = vunpack.c.l.b16 %v428
  %v520 = vunpack.c.h.b16 %v428
  %v521 = vunpack.c.l.b16 %v429
  %v522 = vunpack.c.h.b16 %v429
  %v523 = vunpack.c.l.b16 %v430
  %v524 = vunpack.c.h.b16 %v430
  %v525 = vunpack.c.l.b16 %v431
  %v526 = vunpack.c.h.b16 %v431
  %v527 = vunpack.c.l.b16 %v432
  %v528 = vunpack.c.h.b16 %v432
  %v529 = vunpack.c.l.b16 %v433
  %v530 = vunpack.c.h.b16 %v433
  %v531 = vunpack.c.l.b16 %v434
  %v532 = vunpack.c.h.b16 %v434
  %v533 = vunpack.c.l.b16 %v435
  %v534 = vunpack.c.h.b16 %v435
  %v535 = vunpack.c.l.b16 %v436
  %v536 = vunpack.c.h.b16 %v436
  %v537 = vunpack.c.l.b16 %v437
  %v538 = vunpack.c.h.b16 %v437
  %v539 = vunpack.c.l.b16 %v438
  %v540 = vunpack.c.h.b16 %v438
  %v541 = vunpack.c.l.b16 %v439
  %v542 = vunpack.c.h.b16 %v439
  %v543 = vunpack.c.l.b16 %v440
  %v544 = vunpack.c.h.b16 %v440
  %v545 = vunpack.c.l.b16 %v441
  %v546 = vunpack.c.h.b16 %v441
  %v547 = vunpack.c.l.b16 %v442
  %v548 = vunpack.c.h.b16 %v442
  %v549 = vunpack.c.l.b16 %v443
  %v550 = vunpack.c.h.b16 %v443
  %v551 = vunpack.c.l.b16 %v444
  %v552 = vunpack.c.h.b16 %v444
  %v553 = vunpack.c.l.b16 %v445
  %v554 = vunpack.c.h.b16 %v445
  %v555 = vunpack.c.l.b16 %v446
  %v556 = vunpack.c.h.b16 %v446
  %v557 = vunpack.c.l.b16 %v447
  %v558 = vunpack.c.h.b16 %v447
  %v559 = vunpack.c.l.b16 %v448
  %v560 = vunpack.c.h.b16 %v448
  %v561 = vunpack.c.l.b16 %v449
  %v562 = vunpack.c.h.b16 %v449
  %v563 = vunpack.c.l.b16 %v450
  %v564 = vunpack.c.h.b16 %v450
  %v565 = vunpack.c.l.b16 %v451
  %v566 = vunpack.c.h.b16 %v451
  %v567 = vunpack.c.l.b16 %v452
  %v568 = vunpack.c.h.b16 %v452
  %v569 = vunpack.c.l.b16 %v453
  %v570 = vunpack.c.h.b16 %v453
  %v571 = vunpack.c.l.b16 %v454
  %v572 = vunpack.c.h.b16 %v454
  %v573 = vunpack.c.l.b16 %v455
  %v574 = vunpack.c.h.b16 %v455
  %v575 = vpack.c.b16 %v513, %v511
  %v576 = vpack.c.b16 %v514, %v512
  %v577 = vpack.c.b16 %v517, %v515
  %v578 = vpack.c.b16 %v518, %v516
  %v579 = vpack.c.b16 %v521, %v519
  %v580 = vpack.c.b16 %v522, %v520
  %v581 = vpack.c.b16 %v525, %v523
  %v582 = vpack.c.b16 %v526, %v524
  %v583 = vpack.c.b16 %v529, %v527
  %v584 = vpack.c.b16 %v530, %v528
  %v585 = vpack.c.b16 %v533, %v531
  %v586 = vpack.c.b16 %v534, %v532
  %v587 = vpack.c.b16 %v537, %v535
  %v588 = vpack.c.b16 %v538, %v536
  %v589 = vpack.c.b16 %v541, %v539
  %v590 = vpack.c.b16 %v542, %v540
  %v591 = vpack.c.b16 %v545, %v543
  %v592 = vpack.c.b16 %v546, %v544
  %v593 = vpack.c.b16 %v549, %v547
  %v594 = vpack.c.b16 %v550, %v548
  %v595 = vpack.c.b16 %v553, %v551
  %v596 = vpack.c.b16 %v554, %v552
  %v597 = vpack.c.b16 %v557, %v555
  %v598 = vpack.c.b16 %v558, %v556
  %v599 = vpack.c.b16 %v561, %v559
  %v600 = vpack.c.b16 %v562, %v560
  %v601 = vpack.c.b16 %v565, %v563
  %v602 = vpack.c.b16 %v566, %v564
  %v603 = vpack.c.b16 %v569, %v567
  %v604 = vpack.c.b16 %v570, %v568
  %v605 = vpack.c.b16 %v573, %v571
  %v606 = vpack.c.b16 %v574, %v572
  %639 = vmatprep.subr.bf16.mxu0 0
  %640 = vmatpush1.bf16.msra.mxu0 %v456
  %641 = vmatprep.subr.bf16.mxu0 0
  %642 = vmatpush1.bf16.msra.mxu0 %v457
  %643 = vmatprep.subr.bf16.mxu0 0
  %644 = vmatpush1.bf16.msra.mxu0 %v458
  %645 = vmatprep.subr.bf16.mxu0 0
  %646 = vmatpush1.bf16.msra.mxu0 %v459
  %647 = vmatprep.subr.bf16.mxu0 0
  %648 = vmatpush1.bf16.msra.mxu0 %v460
  %649 = vmatprep.subr.bf16.mxu0 0
  %650 = vmatpush1.bf16.msra.mxu0 %v461
  %651 = vmatprep.subr.bf16.mxu0 0
  %652 = vmatpush1.bf16.msra.mxu0 %v462
  %653 = vmatprep.subr.bf16.mxu0 0
  %654 = vmatpush1.bf16.msra.mxu0 %v463
  %655 = vmatprep.subr.bf16.mxu0 0
  %656 = vmatpush1.bf16.msra.mxu0 %v464
  %657 = vmatprep.subr.bf16.mxu0 0
  %658 = vmatpush1.bf16.msra.mxu0 %v465
  %659 = vmatprep.subr.bf16.mxu0 0
  %660 = vmatpush1.bf16.msra.mxu0 %v466
  %661 = vmatprep.subr.bf16.mxu0 0
  %662 = vmatpush1.bf16.msra.mxu0 %v467
  %663 = vmatprep.subr.bf16.mxu0 0
  %664 = vmatpush1.bf16.msra.mxu0 %v468
  %665 = vmatprep.subr.bf16.mxu0 0
  %666 = vmatpush1.bf16.msra.mxu0 %v469
  %667 = vmatprep.subr.bf16.mxu0 0
  %668 = vmatpush1.bf16.msra.mxu0 %v470
  %669 = vmatprep.subr.bf16.mxu0 0
  %670 = vmatpush1.bf16.msra.mxu0 %v471
  %671 = vmatprep.mubr.bf16.mxu0 %v576
  %672 = vmatmul.mubr.bf16.gmra.mrb[0].mxu0 %v575
  %v673 = vpop.f32.mrb[0].mxu0
  %v674 = vadd.f32 %v477, %v673
  %v675 = vpop.f32.mrb[0].mxu0
  %v676 = vpop.f32.mrb[0].mxu0
  %v677 = vadd.f32 %v477, %v676
  %v678 = vpop.f32.mrb[0].mxu0
  %679 = vmatprep.mubr.bf16.mxu0 %v578
  %680 = vmatmul.mubr.bf16.gmra.mrb[0].mxu0 %v577
  %v681 = vpop.f32.mrb[0].mxu0
  %v682 = vadd.f32 %v477, %v681
  %v683 = vpop.f32.mrb[0].mxu0
  %v684 = vpop.f32.mrb[0].mxu0
  %v685 = vadd.f32 %v477, %v684
  %v686 = vpop.f32.mrb[0].mxu0
  %687 = vmatprep.mubr.bf16.mxu0 %v580
  %688 = vmatmul.mubr.bf16.gmra.mrb[0].mxu0 %v579
  %v689 = vpop.f32.mrb[0].mxu0
  %v690 = vadd.f32 %v477, %v689
  %v691 = vpop.f32.mrb[0].mxu0
  %v692 = vpop.f32.mrb[0].mxu0
  %v693 = vadd.f32 %v477, %v692
  %v694 = vpop.f32.mrb[0].mxu0
  %695 = vmatprep.mubr.bf16.mxu0 %v582
  %696 = vmatmul.mubr.bf16.gmra.mrb[0].mxu0 %v581
  %v697 = vpop.f32.mrb[0].mxu0
  %v698 = vadd.f32 %v477, %v697
  %v699 = vpop.f32.mrb[0].mxu0
  %v700 = vpop.f32.mrb[0].mxu0
  %v701 = vadd.f32 %v477, %v700
  %v702 = vpop.f32.mrb[0].mxu0
  %703 = vmatprep.mubr.bf16.mxu0 %v584
  %704 = vmatmul.mubr.bf16.gmra.mrb[0].mxu0 %v583
  %v705 = vpop.f32.mrb[0].mxu0
  %v706 = vadd.f32 %v477, %v705
  %v707 = vpop.f32.mrb[0].mxu0
  %v708 = vpop.f32.mrb[0].mxu0
  %v709 = vadd.f32 %v477, %v708
  %v710 = vpop.f32.mrb[0].mxu0
  %711 = vmatprep.mubr.bf16.mxu0 %v586
  %712 = vmatmul.mubr.bf16.gmra.mrb[0].mxu0 %v585
  %v713 = vpop.f32.mrb[0].mxu0
  %v714 = vadd.f32 %v477, %v713
  %v715 = vpop.f32.mrb[0].mxu0
  %v716 = vpop.f32.mrb[0].mxu0
  %v717 = vadd.f32 %v477, %v716
  %v718 = vpop.f32.mrb[0].mxu0
  %719 = vmatprep.mubr.bf16.mxu0 %v588
  %720 = vmatmul.mubr.bf16.gmra.mrb[0].mxu0 %v587
  %v721 = vpop.f32.mrb[0].mxu0
  %v722 = vadd.f32 %v477, %v721
  %v723 = vpop.f32.mrb[0].mxu0
  %v724 = vpop.f32.mrb[0].mxu0
  %v725 = vadd.f32 %v477, %v724
  %v726 = vpop.f32.mrb[0].mxu0
  %727 = vmatprep.mubr.bf16.mxu0 %v590
  %728 = vmatmul.mubr.bf16.gmra.mrb[0].mxu0 %v589
  %v729 = vpop.f32.mrb[0].mxu0
  %v730 = vadd.f32 %v477, %v729
  %v731 = vpop.f32.mrb[0].mxu0
  %v732 = vpop.f32.mrb[0].mxu0
  %v733 = vadd.f32 %v477, %v732
  %v734 = vpop.f32.mrb[0].mxu0
  %735 = vmatprep.mubr.bf16.mxu0 %v592
  %736 = vmatmul.mubr.bf16.gmra.mrb[0].mxu0 %v591
  %v737 = vpop.f32.mrb[0].mxu0
  %v738 = vadd.f32 %v477, %v737
  %v739 = vpop.f32.mrb[0].mxu0
  %v740 = vpop.f32.mrb[0].mxu0
  %v741 = vadd.f32 %v477, %v740
  %v742 = vpop.f32.mrb[0].mxu0
  %743 = vmatprep.mubr.bf16.mxu0 %v594
  %744 = vmatmul.mubr.bf16.gmra.mrb[0].mxu0 %v593
  %v745 = vpop.f32.mrb[0].mxu0
  %v746 = vadd.f32 %v477, %v745
  %v747 = vpop.f32.mrb[0].mxu0
  %v748 = vpop.f32.mrb[0].mxu0
  %v749 = vadd.f32 %v477, %v748
  %v750 = vpop.f32.mrb[0].mxu0
  %751 = vmatprep.mubr.bf16.mxu0 %v596
  %752 = vmatmul.mubr.bf16.gmra.mrb[0].mxu0 %v595
  %v753 = vpop.f32.mrb[0].mxu0
  %v754 = vadd.f32 %v477, %v753
  %v755 = vpop.f32.mrb[0].mxu0
  %v756 = vpop.f32.mrb[0].mxu0
  %v757 = vadd.f32 %v477, %v756
  %v758 = vpop.f32.mrb[0].mxu0
  %759 = vmatprep.mubr.bf16.mxu0 %v598
  %760 = vmatmul.mubr.bf16.gmra.mrb[0].mxu0 %v597
  %v761 = vpop.f32.mrb[0].mxu0
  %v762 = vadd.f32 %v477, %v761
  %v763 = vpop.f32.mrb[0].mxu0
  %v764 = vpop.f32.mrb[0].mxu0
  %v765 = vadd.f32 %v477, %v764
  %v766 = vpop.f32.mrb[0].mxu0
  %767 = vmatprep.mubr.bf16.mxu0 %v600
  %768 = vmatmul.mubr.bf16.gmra.mrb[0].mxu0 %v599
  %v769 = vpop.f32.mrb[0].mxu0
  %v770 = vadd.f32 %v477, %v769
  %v771 = vpop.f32.mrb[0].mxu0
  %v772 = vpop.f32.mrb[0].mxu0
  %v773 = vadd.f32 %v477, %v772
  %v774 = vpop.f32.mrb[0].mxu0
  %775 = vmatprep.mubr.bf16.mxu0 %v602
  %776 = vmatmul.mubr.bf16.gmra.mrb[0].mxu0 %v601
  %v777 = vpop.f32.mrb[0].mxu0
  %v778 = vadd.f32 %v477, %v777
  %v779 = vpop.f32.mrb[0].mxu0
  %v780 = vpop.f32.mrb[0].mxu0
  %v781 = vadd.f32 %v477, %v780
  %v782 = vpop.f32.mrb[0].mxu0
  %783 = vmatprep.mubr.bf16.mxu0 %v604
  %784 = vmatmul.mubr.bf16.gmra.mrb[0].mxu0 %v603
  %v785 = vpop.f32.mrb[0].mxu0
  %v786 = vadd.f32 %v477, %v785
  %v787 = vpop.f32.mrb[0].mxu0
  %v788 = vpop.f32.mrb[0].mxu0
  %v789 = vadd.f32 %v477, %v788
  %v790 = vpop.f32.mrb[0].mxu0
  %791 = vmatprep.mubr.bf16.mxu0 %v606
  %792 = vmatmul.mubr.bf16.gmra.mrb[0].mxu0 %v605
  %v793 = vpop.f32.mrb[0].mxu0
  %v794 = vadd.f32 %v477, %v793
  %v795 = vpop.f32.mrb[0].mxu0
  %v796 = vpop.f32.mrb[0].mxu0
  %v797 = vadd.f32 %v477, %v796
  %v798 = vpop.f32.mrb[0].mxu0
  %799 = vdwg.mxu0
  %v800 = vmax.f32 %v674, 0.0
  %v801 = vmax.f32 %v677, 0.0
  %v802 = vmax.f32 %v682, 0.0
  %v803 = vmax.f32 %v685, 0.0
  %v804 = vmax.f32 %v690, 0.0
  %v805 = vmax.f32 %v693, 0.0
  %v806 = vmax.f32 %v698, 0.0
  %v807 = vmax.f32 %v701, 0.0
  %v808 = vmax.f32 %v706, 0.0
  %v809 = vmax.f32 %v709, 0.0
  %v810 = vmax.f32 %v714, 0.0
  %v811 = vmax.f32 %v717, 0.0
  %v812 = vmax.f32 %v722, 0.0
  %v813 = vmax.f32 %v725, 0.0
  %v814 = vmax.f32 %v730, 0.0
  %v815 = vmax.f32 %v733, 0.0
  %v816 = vmax.f32 %v738, 0.0
  %v817 = vmax.f32 %v741, 0.0
  %v818 = vmax.f32 %v746, 0.0
  %v819 = vmax.f32 %v749, 0.0
  %v820 = vmax.f32 %v754, 0.0
  %v821 = vmax.f32 %v757, 0.0
  %v822 = vmax.f32 %v762, 0.0
  %v823 = vmax.f32 %v765, 0.0
  %v824 = vmax.f32 %v770, 0.0
  %v825 = vmax.f32 %v773, 0.0
  %v826 = vmax.f32 %v778, 0.0
  %v827 = vmax.f32 %v781, 0.0
  %v828 = vmax.f32 %v786, 0.0
  %v829 = vmax.f32 %v789, 0.0
  %v830 = vmax.f32 %v794, 0.0
  %v831 = vmax.f32 %v797, 0.0
  %v832 = vpack.c.bf16 %v801, %v800
  %v833 = vpack.c.bf16 %v803, %v802
  %v834 = vpack.c.bf16 %v805, %v804
  %v835 = vpack.c.bf16 %v807, %v806
  %v836 = vpack.c.bf16 %v809, %v808
  %v837 = vpack.c.bf16 %v811, %v810
  %v838 = vpack.c.bf16 %v813, %v812
  %v839 = vpack.c.bf16 %v815, %v814
  %v840 = vpack.c.bf16 %v817, %v816
  %v841 = vpack.c.bf16 %v819, %v818
  %v842 = vpack.c.bf16 %v821, %v820
  %v843 = vpack.c.bf16 %v823, %v822
  %v844 = vpack.c.bf16 %v825, %v824
  %v845 = vpack.c.bf16 %v827, %v826
  %v846 = vpack.c.bf16 %v829, %v828
  %v847 = vpack.c.bf16 %v831, %v830
  %v848 = vld [vmem:[%s5] sm:$0xf]
  %v849 = vld [vmem:[%s5 + $0x4] sm:$0xf]
  %v850 = vld [vmem:[%s5 + $0x8] sm:$0xf]
  %v851 = vld [vmem:[%s5 + $0xc] sm:$0xf]
  %v852 = vld [vmem:[%s5 + $0x10] sm:$0xf]
  %v853 = vld [vmem:[%s5 + $0x14] sm:$0xf]
  %v854 = vld [vmem:[%s5 + $0x18] sm:$0xf]
  %v855 = vld [vmem:[%s5 + $0x1c] sm:$0xf]
  %v856 = vld [vmem:[%s5 + $0x20] sm:$0xf]
  %v857 = vld [vmem:[%s5 + $0x24] sm:$0xf]
  %v858 = vld [vmem:[%s5 + $0x28] sm:$0xf]
  %v859 = vld [vmem:[%s5 + $0x2c] sm:$0xf]
  %v860 = vld [vmem:[%s5 + $0x30] sm:$0xf]
  %v861 = vld [vmem:[%s5 + $0x34] sm:$0xf]
  %v862 = vld [vmem:[%s5 + $0x38] sm:$0xf]
  %v863 = vld [vmem:[%s5 + $0x3c] sm:$0xf]
  %v880 = vunpack.c.l.b16 %v848
  %v881 = vunpack.c.l.b16 %v849
  %v882 = vunpack.c.l.b16 %v850
  %v883 = vunpack.c.l.b16 %v851
  %v884 = vunpack.c.l.b16 %v852
  %v885 = vunpack.c.l.b16 %v853
  %v886 = vunpack.c.l.b16 %v854
  %v887 = vunpack.c.l.b16 %v855
  %v888 = vunpack.c.l.b16 %v856
  %v889 = vunpack.c.l.b16 %v857
  %v890 = vunpack.c.l.b16 %v858
  %v891 = vunpack.c.l.b16 %v859
  %v892 = vunpack.c.l.b16 %v860
  %v893 = vunpack.c.l.b16 %v861
  %v894 = vunpack.c.l.b16 %v862
  %v895 = vunpack.c.l.b16 %v863
  %v896 = vpack.c.b16 %v881, %v880
  %v897 = vpack.c.b16 %v883, %v882
  %v898 = vpack.c.b16 %v885, %v884
  %v899 = vpack.c.b16 %v887, %v886
  %v900 = vpack.c.b16 %v889, %v888
  %v901 = vpack.c.b16 %v891, %v890
  %v902 = vpack.c.b16 %v893, %v892
  %v903 = vpack.c.b16 %v895, %v894
  %912 = vmatprep.subr.bf16.mxu0 0
  %913 = vmatpush1.bf16.msra.mxu0 %v896
  %914 = vmatprep.subr.bf16.mxu0 0
  %915 = vmatpush1.bf16.msra.mxu0 %v897
  %916 = vmatprep.subr.bf16.mxu0 0
  %917 = vmatpush1.bf16.msra.mxu0 %v898
  %918 = vmatprep.subr.bf16.mxu0 0
  %919 = vmatpush1.bf16.msra.mxu0 %v899
  %920 = vmatprep.subr.bf16.mxu0 0
  %921 = vmatpush1.bf16.msra.mxu0 %v900
  %922 = vmatprep.subr.bf16.mxu0 0
  %923 = vmatpush1.bf16.msra.mxu0 %v901
  %924 = vmatprep.subr.bf16.mxu0 0
  %925 = vmatpush1.bf16.msra.mxu0 %v902
  %926 = vmatprep.subr.bf16.mxu0 0
  %927 = vmatpush1.bf16.msra.mxu0 %v903
  %928 = vmatprep.subr.bf16.mxu0 0
  %929 = vmatpush1.bf16.msra.mxu0 0
  %930 = vmatprep.subr.bf16.mxu0 0
  %931 = vmatpush1.bf16.msra.mxu0 0
  %932 = vmatprep.subr.bf16.mxu0 0
  %933 = vmatpush1.bf16.msra.mxu0 0
  %934 = vmatprep.subr.bf16.mxu0 0
  %935 = vmatpush1.bf16.msra.mxu0 0
  %936 = vmatprep.subr.bf16.mxu0 0
  %937 = vmatpush1.bf16.msra.mxu0 0
  %938 = vmatprep.subr.bf16.mxu0 0
  %939 = vmatpush1.bf16.msra.mxu0 0
  %940 = vmatprep.subr.bf16.mxu0 0
  %941 = vmatpush1.bf16.msra.mxu0 0
  %942 = vmatprep.subr.bf16.mxu0 0
  %943 = vmatpush1.bf16.msra.mxu0 0
  %944 = vmatprep.mubr.bf16.mxu0 0
  %945 = vmatmul.mubr.bf16.gmra.mrb[0].mxu0 %v832
  %v946 = vpop.f32.mrb[0].mxu0
  %v947 = vadd.f32 0.0, %v946
  %v948 = vpop.f32.mrb[0].mxu0
  %v949 = vpop.f32.mrb[0].mxu0
  %v950 = vadd.f32 0.0, %v949
  %v951 = vpop.f32.mrb[0].mxu0
  %952 = vmatprep.mubr.bf16.mxu0 0
  %953 = vmatmul.mubr.bf16.gmra.mrb[0].mxu0 %v833
  %v954 = vpop.f32.mrb[0].mxu0
  %v955 = vadd.f32 0.0, %v954
  %v956 = vpop.f32.mrb[0].mxu0
  %v957 = vpop.f32.mrb[0].mxu0
  %v958 = vadd.f32 0.0, %v957
  %v959 = vpop.f32.mrb[0].mxu0
  %960 = vmatprep.mubr.bf16.mxu0 0
  %961 = vmatmul.mubr.bf16.gmra.mrb[0].mxu0 %v834
  %v962 = vpop.f32.mrb[0].mxu0
  %v963 = vadd.f32 0.0, %v962
  %v964 = vpop.f32.mrb[0].mxu0
  %v965 = vpop.f32.mrb[0].mxu0
  %v966 = vadd.f32 0.0, %v965
  %v967 = vpop.f32.mrb[0].mxu0
  %968 = vmatprep.mubr.bf16.mxu0 0
  %969 = vmatmul.mubr.bf16.gmra.mrb[0].mxu0 %v835
  %v970 = vpop.f32.mrb[0].mxu0
  %v971 = vadd.f32 0.0, %v970
  %v972 = vpop.f32.mrb[0].mxu0
  %v973 = vpop.f32.mrb[0].mxu0
  %v974 = vadd.f32 0.0, %v973
  %v975 = vpop.f32.mrb[0].mxu0
  %976 = vmatprep.mubr.bf16.mxu0 0
  %977 = vmatmul.mubr.bf16.gmra.mrb[0].mxu0 %v836
  %v978 = vpop.f32.mrb[0].mxu0
  %v979 = vadd.f32 0.0, %v978
  %v980 = vpop.f32.mrb[0].mxu0
  %v981 = vpop.f32.mrb[0].mxu0
  %v982 = vadd.f32 0.0, %v981
  %v983 = vpop.f32.mrb[0].mxu0
  %984 = vmatprep.mubr.bf16.mxu0 0
  %985 = vmatmul.mubr.bf16.gmra.mrb[0].mxu0 %v837
  %v986 = vpop.f32.mrb[0].mxu0
  %v987 = vadd.f32 0.0, %v986
  %v988 = vpop.f32.mrb[0].mxu0
  %v989 = vpop.f32.mrb[0].mxu0
  %v990 = vadd.f32 0.0, %v989
  %v991 = vpop.f32.mrb[0].mxu0
  %992 = vmatprep.mubr.bf16.mxu0 0
  %993 = vmatmul.mubr.bf16.gmra.mrb[0].mxu0 %v838
  %v994 = vpop.f32.mrb[0].mxu0
  %v995 = vadd.f32 0.0, %v994
  %v996 = vpop.f32.mrb[0].mxu0
  %v997 = vpop.f32.mrb[0].mxu0
  %v998 = vadd.f32 0.0, %v997
  %v999 = vpop.f32.mrb[0].mxu0
  %1000 = vmatprep.mubr.bf16.mxu0 0
  %1001 = vmatmul.mubr.bf16.gmra.mrb[0].mxu0 %v839
  %v1002 = vpop.f32.mrb[0].mxu0
  %v1003 = vadd.f32 0.0, %v1002
  %v1004 = vpop.f32.mrb[0].mxu0
  %v1005 = vpop.f32.mrb[0].mxu0
  %v1006 = vadd.f32 0.0, %v1005
  %v1007 = vpop.f32.mrb[0].mxu0
  %1008 = vmatprep.mubr.bf16.mxu0 0
  %1009 = vmatmul.mubr.bf16.gmra.mrb[0].mxu0 %v840
  %v1010 = vpop.f32.mrb[0].mxu0
  %v1011 = vadd.f32 0.0, %v1010
  %v1012 = vpop.f32.mrb[0].mxu0
  %v1013 = vpop.f32.mrb[0].mxu0
  %v1014 = vadd.f32 0.0, %v1013
  %v1015 = vpop.f32.mrb[0].mxu0
  %1016 = vmatprep.mubr.bf16.mxu0 0
  %1017 = vmatmul.mubr.bf16.gmra.mrb[0].mxu0 %v841
  %v1018 = vpop.f32.mrb[0].mxu0
  %v1019 = vadd.f32 0.0, %v1018
  %v1020 = vpop.f32.mrb[0].mxu0
  %v1021 = vpop.f32.mrb[0].mxu0
  %v1022 = vadd.f32 0.0, %v1021
  %v1023 = vpop.f32.mrb[0].mxu0
  %1024 = vmatprep.mubr.bf16.mxu0 0
  %1025 = vmatmul.mubr.bf16.gmra.mrb[0].mxu0 %v842
  %v1026 = vpop.f32.mrb[0].mxu0
  %v1027 = vadd.f32 0.0, %v1026
  %v1028 = vpop.f32.mrb[0].mxu0
  %v1029 = vpop.f32.mrb[0].mxu0
  %v1030 = vadd.f32 0.0, %v1029
  %v1031 = vpop.f32.mrb[0].mxu0
  %1032 = vmatprep.mubr.bf16.mxu0 0
  %1033 = vmatmul.mubr.bf16.gmra.mrb[0].mxu0 %v843
  %v1034 = vpop.f32.mrb[0].mxu0
  %v1035 = vadd.f32 0.0, %v1034
  %v1036 = vpop.f32.mrb[0].mxu0
  %v1037 = vpop.f32.mrb[0].mxu0
  %v1038 = vadd.f32 0.0, %v1037
  %v1039 = vpop.f32.mrb[0].mxu0
  %1040 = vmatprep.mubr.bf16.mxu0 0
  %1041 = vmatmul.mubr.bf16.gmra.mrb[0].mxu0 %v844
  %v1042 = vpop.f32.mrb[0].mxu0
  %v1043 = vadd.f32 0.0, %v1042
  %v1044 = vpop.f32.mrb[0].mxu0
  %v1045 = vpop.f32.mrb[0].mxu0
  %v1046 = vadd.f32 0.0, %v1045
  %v1047 = vpop.f32.mrb[0].mxu0
  %1048 = vmatprep.mubr.bf16.mxu0 0
  %1049 = vmatmul.mubr.bf16.gmra.mrb[0].mxu0 %v845
  %v1050 = vpop.f32.mrb[0].mxu0
  %v1051 = vadd.f32 0.0, %v1050
  %v1052 = vpop.f32.mrb[0].mxu0
  %v1053 = vpop.f32.mrb[0].mxu0
  %v1054 = vadd.f32 0.0, %v1053
  %v1055 = vpop.f32.mrb[0].mxu0
  %1056 = vmatprep.mubr.bf16.mxu0 0
  %1057 = vmatmul.mubr.bf16.gmra.mrb[0].mxu0 %v846
  %v1058 = vpop.f32.mrb[0].mxu0
  %v1059 = vadd.f32 0.0, %v1058
  %v1060 = vpop.f32.mrb[0].mxu0
  %v1061 = vpop.f32.mrb[0].mxu0
  %v1062 = vadd.f32 0.0, %v1061
  %v1063 = vpop.f32.mrb[0].mxu0
  %1064 = vmatprep.mubr.bf16.mxu0 0
  %1065 = vmatmul.mubr.bf16.gmra.mrb[0].mxu0 %v847
  %v1066 = vpop.f32.mrb[0].mxu0
  %v1067 = vadd.f32 0.0, %v1066
  %v1068 = vpop.f32.mrb[0].mxu0
  %v1069 = vpop.f32.mrb[0].mxu0
  %v1070 = vadd.f32 0.0, %v1069
  %v1071 = vpop.f32.mrb[0].mxu0
  %1072 = vdwg.mxu0
  %v1073 = vld [vmem:[#allocation3] sm:$0xff]
  %v1074 = vld [vmem:[#allocation3 + $0x8] sm:$0xff]
  %v1075 = vld [vmem:[%s2] sm:$0xff]
  %v1076 = vld [vmem:[%s2 + $0x8] sm:$0xff]
  %v1077 = vpack.c.bf16 %v950, %v947
  %v1078 = vpack.c.bf16 %v958, %v955
  %v1079 = vpack.c.bf16 %v966, %v963
  %v1080 = vpack.c.bf16 %v974, %v971
  %v1081 = vpack.c.bf16 %v982, %v979
  %v1082 = vpack.c.bf16 %v990, %v987
  %v1083 = vpack.c.bf16 %v998, %v995
  %v1084 = vpack.c.bf16 %v1006, %v1003
  %v1085 = vpack.c.bf16 %v1014, %v1011
  %v1086 = vpack.c.bf16 %v1022, %v1019
  %v1087 = vpack.c.bf16 %v1030, %v1027
  %v1088 = vpack.c.bf16 %v1038, %v1035
  %v1089 = vpack.c.bf16 %v1046, %v1043
  %v1090 = vpack.c.bf16 %v1054, %v1051
  %v1091 = vpack.c.bf16 %v1062, %v1059
  %v1092 = vpack.c.bf16 %v1070, %v1067
  %v1095 = vunpack.c.l.b16 %v1075
  %v1096 = vunpack.c.h.b16 %v1075
  %v1097 = vunpack.c.l.b16 %v1076
  %v1098 = vunpack.c.h.b16 %v1076
  %v1099 = vpack.c.b16 %v1097, %v1095
  %v1100 = vpack.c.b16 %v1098, %v1096
  %1103 = vmatprep.subr.bf16.mxu0 0
  %1104 = vmatpush1.bf16.msra.mxu0 %v1077
  %1105 = vmatprep.subr.bf16.mxu0 0
  %1106 = vmatpush1.bf16.msra.mxu0 %v1078
  %1107 = vmatprep.subr.bf16.mxu0 0
  %1108 = vmatpush1.bf16.msra.mxu0 %v1079
  %1109 = vmatprep.subr.bf16.mxu0 0
  %1110 = vmatpush1.bf16.msra.mxu0 %v1080
  %1111 = vmatprep.subr.bf16.mxu0 0
  %1112 = vmatpush1.bf16.msra.mxu0 %v1081
  %1113 = vmatprep.subr.bf16.mxu0 0
  %1114 = vmatpush1.bf16.msra.mxu0 %v1082
  %1115 = vmatprep.subr.bf16.mxu0 0
  %1116 = vmatpush1.bf16.msra.mxu0 %v1083
  %1117 = vmatprep.subr.bf16.mxu0 0
  %1118 = vmatpush1.bf16.msra.mxu0 %v1084
  %1119 = vmatprep.subr.bf16.mxu0 0
  %1120 = vmatpush1.bf16.msra.mxu0 %v1085
  %1121 = vmatprep.subr.bf16.mxu0 0
  %1122 = vmatpush1.bf16.msra.mxu0 %v1086
  %1123 = vmatprep.subr.bf16.mxu0 0
  %1124 = vmatpush1.bf16.msra.mxu0 %v1087
  %1125 = vmatprep.subr.bf16.mxu0 0
  %1126 = vmatpush1.bf16.msra.mxu0 %v1088
  %1127 = vmatprep.subr.bf16.mxu0 0
  %1128 = vmatpush1.bf16.msra.mxu0 %v1089
  %1129 = vmatprep.subr.bf16.mxu0 0
  %1130 = vmatpush1.bf16.msra.mxu0 %v1090
  %1131 = vmatprep.subr.bf16.mxu0 0
  %1132 = vmatpush1.bf16.msra.mxu0 %v1091
  %1133 = vmatprep.subr.bf16.mxu0 0
  %1134 = vmatpush1.bf16.msra.mxu0 %v1092
  %1135 = vmatprep.mubr.bf16.mxu0 %v1100
  %1136 = vmatmul.mubr.bf16.gmra.mrb[0].mxu0 %v1099
  %v1137 = vpop.f32.mrb[0].mxu0
  %v1138 = vadd.f32 0.0, %v1137
  %v1139 = vpop.f32.mrb[0].mxu0
  %v1140 = vpop.f32.mrb[0].mxu0
  %v1141 = vadd.f32 0.0, %v1140
  %v1142 = vpop.f32.mrb[0].mxu0
  %1143 = vdwg.mxu0
  %v1144 = vadd.f32 %v1073, %v1138
  %v1145 = vadd.f32 %v1074, %v1141
  %1146 = vst [vmem:[#allocation3] sm:$0xff] %v1144
  %1147 = vst [vmem:[#allocation3 + $0x8] sm:$0xff] %v1145
  // Predicated region
  $region42: #{gcn_forward.1} parent=0 // pred_check
    %p1148 = pneg %p33
  $region43: #{gcn_forward.1} parent=0 // pred_check_branch
    %1150 = sbr.rel (%p1148) target = $region45
  $region44: #{gcn_forward.1} parent=0 // pred_region
    %v1151 = vld [vmem:[#allocation3] sm:$0xff]
    %v1152 = vld [vmem:[#allocation3 + $0x8] sm:$0xff]
    %v1153 = vld [vmem:[%s6] sm:$0x1]
    %v1155 = vlaneseq
    %v1156 = vshrl.u32 %v1155, 7
    %v1157 = vsub.s32 0, %v1156
    %v1158 = vrot.slane %v1153, %v1157
    %v1160 = vadd.f32 %v1151, %v1158
    %v1161 = vadd.f32 %v1152, %v1158
    %v1162 = vpack.c.bf16 %v1161, %v1160
    %v1163 = vld [vmem:[%s7] sm:$0xf]
    %v1164 = vld [vmem:[%s7 + $0x4] sm:$0xf]
    %v1165 = vld [vmem:[%s7 + $0x8] sm:$0xf]
    %v1166 = vld [vmem:[%s7 + $0xc] sm:$0xf]
    %v1167 = vld [vmem:[%s7 + $0x10] sm:$0xf]
    %v1168 = vld [vmem:[%s7 + $0x14] sm:$0xf]
    %v1169 = vld [vmem:[%s7 + $0x18] sm:$0xf]
    %v1170 = vld [vmem:[%s7 + $0x1c] sm:$0xf]
    %v1171 = vld [vmem:[%s7 + $0x20] sm:$0xf]
    %v1172 = vld [vmem:[%s7 + $0x24] sm:$0xf]
    %v1173 = vld [vmem:[%s7 + $0x28] sm:$0xf]
    %v1174 = vld [vmem:[%s7 + $0x2c] sm:$0xf]
    %v1175 = vld [vmem:[%s7 + $0x30] sm:$0xf]
    %v1176 = vld [vmem:[%s7 + $0x34] sm:$0xf]
    %v1177 = vld [vmem:[%s7 + $0x38] sm:$0xf]
    %v1178 = vld [vmem:[%s7 + $0x3c] sm:$0xf]
    %v1179 = vld [vmem:[%s8] sm:$0x1]
    %v1181 = vlaneseq
    %v1182 = vshrl.u32 %v1181, 7
    %v1183 = vsub.s32 0, %v1182
    %v1184 = vrot.slane %v1179, %v1183
    %v1202 = vunpack.c.l.b16 %v1163
    %v1203 = vunpack.c.l.b16 %v1164
    %v1204 = vunpack.c.l.b16 %v1165
    %v1205 = vunpack.c.l.b16 %v1166
    %v1206 = vunpack.c.l.b16 %v1167
    %v1207 = vunpack.c.l.b16 %v1168
    %v1208 = vunpack.c.l.b16 %v1169
    %v1209 = vunpack.c.l.b16 %v1170
    %v1210 = vunpack.c.l.b16 %v1171
    %v1211 = vunpack.c.l.b16 %v1172
    %v1212 = vunpack.c.l.b16 %v1173
    %v1213 = vunpack.c.l.b16 %v1174
    %v1214 = vunpack.c.l.b16 %v1175
    %v1215 = vunpack.c.l.b16 %v1176
    %v1216 = vunpack.c.l.b16 %v1177
    %v1217 = vunpack.c.l.b16 %v1178
    %v1218 = vpack.c.b16 %v1203, %v1202
    %v1219 = vpack.c.b16 %v1205, %v1204
    %v1220 = vpack.c.b16 %v1207, %v1206
    %v1221 = vpack.c.b16 %v1209, %v1208
    %v1222 = vpack.c.b16 %v1211, %v1210
    %v1223 = vpack.c.b16 %v1213, %v1212
    %v1224 = vpack.c.b16 %v1215, %v1214
    %v1225 = vpack.c.b16 %v1217, %v1216
    %1234 = vmatprep.subr.bf16.mxu0 0
    %1235 = vmatpush1.bf16.msra.mxu0 %v1218
    %1236 = vmatprep.subr.bf16.mxu0 0
    %1237 = vmatpush1.bf16.msra.mxu0 %v1219
    %1238 = vmatprep.subr.bf16.mxu0 0
    %1239 = vmatpush1.bf16.msra.mxu0 %v1220
    %1240 = vmatprep.subr.bf16.mxu0 0
    %1241 = vmatpush1.bf16.msra.mxu0 %v1221
    %1242 = vmatprep.subr.bf16.mxu0 0
    %1243 = vmatpush1.bf16.msra.mxu0 %v1222
    %1244 = vmatprep.subr.bf16.mxu0 0
    %1245 = vmatpush1.bf16.msra.mxu0 %v1223
    %1246 = vmatprep.subr.bf16.mxu0 0
    %1247 = vmatpush1.bf16.msra.mxu0 %v1224
    %1248 = vmatprep.subr.bf16.mxu0 0
    %1249 = vmatpush1.bf16.msra.mxu0 %v1225
    %1250 = vmatprep.subr.bf16.mxu0 0
    %1251 = vmatpush1.bf16.msra.mxu0 0
    %1252 = vmatprep.subr.bf16.mxu0 0
    %1253 = vmatpush1.bf16.msra.mxu0 0
    %1254 = vmatprep.subr.bf16.mxu0 0
    %1255 = vmatpush1.bf16.msra.mxu0 0
    %1256 = vmatprep.subr.bf16.mxu0 0
    %1257 = vmatpush1.bf16.msra.mxu0 0
    %1258 = vmatprep.subr.bf16.mxu0 0
    %1259 = vmatpush1.bf16.msra.mxu0 0
    %1260 = vmatprep.subr.bf16.mxu0 0
    %1261 = vmatpush1.bf16.msra.mxu0 0
    %1262 = vmatprep.subr.bf16.mxu0 0
    %1263 = vmatpush1.bf16.msra.mxu0 0
    %1264 = vmatprep.subr.bf16.mxu0 0
    %1265 = vmatpush1.bf16.msra.mxu0 0
    %1266 = vmatprep.mubr.bf16.mxu0 0
    %1267 = vmatmul.mubr.bf16.gmra.mrb[0].mxu0 %v1162
    %v1268 = vpop.f32.mrb[0].mxu0
    %v1269 = vadd.f32 %v1184, %v1268
    %v1270 = vpop.f32.mrb[0].mxu0
    %v1271 = vpop.f32.mrb[0].mxu0
    %v1272 = vadd.f32 %v1184, %v1271
    %v1273 = vpop.f32.mrb[0].mxu0
    %1274 = vdwg.mxu0
    %v1275 = vlaneseq
    %v1276 = vand.u32 %v1275, 127
    %vm1277 = vcmp.lt.s32.totalorder %v1276, 8
    %v1278 = vsel %vm1277, %v1269, -1e+30
    %v1279 = vsel %vm1277, %v1272, -1e+30
    %1280 = vmax.xlane.f32.xlu0 %v1278
    %v1281 = vpop.xlane.xlu0 %1280
    %1282 = vmax.xlane.f32.xlu0 %v1279
    %v1283 = vpop.xlane.xlu0 %1282
    %v1284 = vsub.f32 %v1278, %v1281
    %v1285 = vsub.f32 %v1279, %v1283
    %v1286 = vmul.f32 %v1284, 1.442695
    %v1287 = vpow.pop %v1286
    %v1288 = vmul.f32 %v1285, 1.442695
    %v1289 = vpow.pop %v1288
    %v1290 = vsel %vm1277, %v1287, 0.0
    %v1291 = vsel %vm1277, %v1289, 0.0
    %1292 = vadd.xlane.f32.xlu0 %v1290
    %v1293 = vpop.xlane.xlu0 %1292
    %1294 = vadd.xlane.f32.xlu0 %v1291
    %v1295 = vpop.xlane.xlu0 %1294
    %v1296 = vlog2.pop %v1293
    %v1297 = vmul.f32 %v1296, 0.6931472
    %v1298 = vlog2.pop %v1295
    %v1299 = vmul.f32 %v1298, 0.6931472
    %v1300 = vsub.f32 %v1284, %v1297
    %v1301 = vsub.f32 %v1285, %v1299
    %1302 = vst [vmem:[%s9] sm:$0xff] %v1300
    %1303 = vst [vmem:[%s9 + $0x8] sm:$0xff] %v1301
  $region45: #{gcn_forward.1} parent=0 // pred_fallthru
    _
  // Predicated region
  $region46: #{gcn_forward.1} parent=0 // pred_check
    _
  $region47: #{gcn_forward.1} parent=0 // pred_check_branch
    %1305 = sbr.rel (0) target = $region49
  $region48: #{gcn_forward.1} parent=0 // pred_region
    _
  $region49: #{gcn_forward.1} parent=0 // pred_fallthru
    _
  // Predicated region
  $region50: #{gcn_forward.1} parent=0 // pred_check
    _
  $region51: #{gcn_forward.1} parent=0 // pred_check_branch
    %1307 = sbr.rel (0) target = $region53
  $region52: #{gcn_forward.1} parent=0 // pred_region
    _
  $region53: #{gcn_forward.1} parent=0 // pred_fallthru
    _

</llo_original>
